<compile_context>
chip_gen: v7x
topology: tpu7x:2x2x1
jax: 0.10.0
libtpu: 0.0.40
codegen_flags: <defaults>
</compile_context>

<pallas_src>
import functools

import jax
import jax.numpy as jnp
from jax.experimental import pallas as pl
from jax.experimental.pallas import tpu as pltpu


def _round_up(x, m):
    return ((x + m - 1) // m) * m


def _cdiv(a, b):
    return (a + b - 1) // b


def mlp_kernel(x_ref, w1_ref, b1_ref, w2_ref, b2_ref, o_ref):
    """One batch tile of relu(x @ W1 + b1) @ W2 + b2 (f32 accumulation)."""
    # Cast x to the matmul-operand dtype inside the kernel (no wrapper pass).
    x = x_ref[...].astype(w1_ref.dtype)
    h = jnp.dot(x, w1_ref[...], preferred_element_type=jnp.float32)
    h = h + b1_ref[...]                 # (TM, Hp) + (1, Hp) broadcast, f32
    h = jnp.maximum(h, 0.0)             # nn.ReLU
    h = h.astype(w2_ref.dtype)          # MXU operand dtype (f32 or bf16)
    o = jnp.dot(h, w2_ref[...], preferred_element_type=jnp.float32)
    o = o + b2_ref[...]                 # out_activation = nn.Identity
    o_ref[...] = o.astype(o_ref.dtype)


def prepare_params(w1, b1, w2, b2, *, compute_dtype=jnp.float32,
                   pad_out_lanes=False):
    """One-time param prep (hoisted out of the per-call path).

    Pads hidden dim to a multiple of 128 (bit-exact) and optionally pads the
    output dim to a lane multiple; casts matmul operands to `compute_dtype`
    while keeping biases in f32.  Returns (params, out_dim).
    """
    in_dim, hidden = w1.shape
    out_dim = w2.shape[1]
    hid_p = _round_up(hidden, 128)
    out_p = _round_up(out_dim, 128) if pad_out_lanes else out_dim

    w1p = jnp.pad(w1, ((0, 0), (0, hid_p - hidden))).astype(compute_dtype)
    b1p = jnp.pad(b1, ((0, 0), (0, hid_p - hidden))).astype(jnp.float32)
    w2p = jnp.pad(w2, ((0, hid_p - hidden), (0, out_p - out_dim))).astype(compute_dtype)
    b2p = jnp.pad(b2, ((0, 0), (0, out_p - out_dim))).astype(jnp.float32)
    return (w1p, b1p, w2p, b2p), out_dim


@functools.partial(jax.jit, static_argnames=("out_dim", "block_rows"))
def mlp_forward(x, params, *, out_dim, block_rows=1024):
    """Fused MLP forward.  x: (B, in_dim); params from prepare_params()."""
    w1, b1, w2, b2 = params
    B, in_dim = x.shape
    hid_p = w1.shape[1]
    out_cols = w2.shape[1]
    compute_dtype = w1.dtype

    # --- batch padding: sublane multiple only (8 f32 / 16 bf16), NOT to TM.
    sub = 16 if jnp.dtype(compute_dtype) == jnp.dtype(jnp.bfloat16) else 8
    B_p = _round_up(B, sub)
    if B_p != B:
        x = jnp.pad(x, ((0, B_p - B), (0, 0)))

    # --- tile selection: large tiles (amortize ~0.35us/step, ~86% HBM roofline
    # at 1024 rows), balanced so the ragged last tile wastes little, and >= 2
    # grid steps whenever possible so v7x's second TensorCore gets work.
    if B_p >= 2 * sub:
        n_target = max(2, _cdiv(B_p, block_rows))
    else:
        n_target = 1
    TM = min(B_p, _round_up(_cdiv(B_p, n_target), sub))

    # --- VMEM guard (v7x: 64 MiB physical / 32 MiB scoped; v5e scoped 16 MiB).
    w_bytes = jnp.dtype(compute_dtype).itemsize
    x_bytes = jnp.dtype(x.dtype).itemsize
    o_bytes = w_bytes
    resident = (in_dim * hid_p + hid_p * out_cols) * w_bytes + (hid_p + out_cols) * 4

    def _plan_bytes(tm):
        streamed = 2 * tm * (in_dim * x_bytes + out_cols * o_bytes)  # dbl-buffered
        scratch = tm * hid_p * 4                                     # f32 hidden
        return resident + streamed + scratch

    VMEM_BUDGET = 48 << 20
    while _plan_bytes(TM) > VMEM_BUDGET and TM > sub:
        TM = max(sub, _round_up(TM // 2, sub))
    num_tiles = _cdiv(B_p, TM)

    vmem_limit = None
    est = _plan_bytes(TM)
    if est > (12 << 20):  # stay clear of v5e's 16 MiB scoped default
        vmem_limit = min(_round_up(int(est * 3 // 2), 1 << 20), 64 << 20)

    cparams = dict(dimension_semantics=("parallel",))
    if vmem_limit is not None:
        cparams["vmem_limit_bytes"] = vmem_limit

    cost = pl.CostEstimate(
        flops=2 * B_p * (in_dim * hid_p + hid_p * out_cols),
        transcendentals=0,
        bytes_accessed=(B_p * in_dim * x_bytes
                        + in_dim * hid_p * w_bytes
                        + hid_p * out_cols * w_bytes
                        + (hid_p + out_cols) * 4
                        + B_p * out_cols * o_bytes),
    )

    out = pl.pallas_call(
        mlp_kernel,
        out_shape=jax.ShapeDtypeStruct((B_p, out_cols), compute_dtype),
        grid_spec=pl.GridSpec(
            grid=(num_tiles,),
            in_specs=[
                pl.BlockSpec((TM, in_dim), lambda i: (i, 0)),           # x tile (streamed)
                pl.BlockSpec((in_dim, hid_p), lambda i: (0, 0)),        # W1 resident
                pl.BlockSpec((1, hid_p), lambda i: (0, 0)),             # b1 resident
                pl.BlockSpec((hid_p, out_cols), lambda i: (0, 0)),      # W2 resident
                pl.BlockSpec((1, out_cols), lambda i: (0, 0)),          # b2 resident
            ],
            out_specs=pl.BlockSpec((TM, out_cols), lambda i: (i, 0)),
        ),
        compiler_params=pltpu.CompilerParams(**cparams),
        cost_estimate=cost,
    )(x, w1, b1, w2, b2)

    return out[:B, :out_dim]


def init_params(key, in_dim, out_dim, hidden_dim=64):
    """PyTorch nn.Linear-style init: U[-1/sqrt(fan_in), 1/sqrt(fan_in)]."""
    k1, k2, k3, k4 = jax.random.split(key, 4)
    bound1 = 1.0 / jnp.sqrt(in_dim)
    bound2 = 1.0 / jnp.sqrt(hidden_dim)
    w1 = jax.random.uniform(k1, (in_dim, hidden_dim), jnp.float32, -bound1, bound1)
    b1 = jax.random.uniform(k2, (1, hidden_dim), jnp.float32, -bound1, bound1)
    w2 = jax.random.uniform(k3, (hidden_dim, out_dim), jnp.float32, -bound2, bound2)
    b2 = jax.random.uniform(k4, (1, out_dim), jnp.float32, -bound2, bound2)
    return w1, b1, w2, b2


if __name__ == "__main__":
    # MLPNetwork defaults (num_layers=2, hidden_dim=64, ReLU, Identity out,
    # no norm layers).  Batch chosen so the grid has >= 2 ragged-tiled steps.
    in_dim, hidden_dim, out_dim = 32, 64, 16
    batch = 1000

    key = jax.random.PRNGKey(0)
    kx, kp = jax.random.split(key)
    x = jax.random.normal(kx, (batch, in_dim), jnp.float32)
    w1, b1, w2, b2 = init_params(kp, in_dim, out_dim, hidden_dim)

    # Plain-JAX reference.
    ref = jnp.maximum(x @ w1 + b1, 0.0) @ w2 + b2

    # f32 path (default): exact check. Unpadded (lane-masked) output store.
    params_f32, odim = prepare_params(w1, b1, w2, b2)
    out = mlp_forward(x, params_f32, out_dim=odim)
    jax.block_until_ready(out)
    assert out.shape == (batch, out_dim)
    assert jnp.allclose(out, ref, atol=1e-5, rtol=1e-5)

    # bf16 matmul-operand path (v6e/v7x), lane-padded output variant: looser check.
    params_bf16, odim2 = prepare_params(
        w1, b1, w2, b2, compute_dtype=jnp.bfloat16, pad_out_lanes=True)
    out_bf16 = mlp_forward(x, params_bf16, out_dim=odim2)
    jax.block_until_ready(out_bf16)
    assert out_bf16.shape == (batch, out_dim)
    assert bool(jnp.max(jnp.abs(out_bf16.astype(jnp.float32) - ref)) < 0.1)

    print("KERNEL_OK")
</pallas_src>

<mosaic_0001>
module attributes {stable_mosaic.version = 11 : i64} {
  func.func @mlp_kernel(%arg0: i32, %arg1: memref<504x32xf32, #tpu.memory_space<vmem>>, %arg2: memref<32x128xf32, #tpu.memory_space<vmem>>, %arg3: memref<1x128xf32, #tpu.memory_space<vmem>>, %arg4: memref<128x16xf32, #tpu.memory_space<vmem>>, %arg5: memref<1x16xf32, #tpu.memory_space<vmem>>, %arg6: memref<504x16xf32, #tpu.memory_space<vmem>>) attributes {dimension_semantics = [#tpu.dimension_semantics<parallel>], iteration_bounds = array<i64: 2>, scalar_prefetch = 0 : i64, scratch_operands = 0 : i64, tpu.core_type = #tpu.core_type<tc>, window_params = [{transform_indices = @transform_0, window_bounds = array<i64: 504, 32>}, {pipeline_mode = #tpu.pipeline_mode<synchronous>, transform_indices = @transform_1, window_bounds = array<i64: 32, 128>}, {pipeline_mode = #tpu.pipeline_mode<synchronous>, transform_indices = @transform_2, window_bounds = array<i64: 1, 128>}, {pipeline_mode = #tpu.pipeline_mode<synchronous>, transform_indices = @transform_3, window_bounds = array<i64: 128, 16>}, {pipeline_mode = #tpu.pipeline_mode<synchronous>, transform_indices = @transform_4, window_bounds = array<i64: 1, 16>}, {transform_indices = @transform_5, window_bounds = array<i64: 504, 16>}]} {
    %c0 = arith.constant 0 : index
    %c0_0 = arith.constant 0 : index
    %0 = vector.load %arg1[%c0, %c0_0] : memref<504x32xf32, #tpu.memory_space<vmem>>, vector<504x32xf32>
    %c0_1 = arith.constant 0 : index
    %c0_2 = arith.constant 0 : index
    %1 = vector.load %arg2[%c0_1, %c0_2] : memref<32x128xf32, #tpu.memory_space<vmem>>, vector<32x128xf32>
    %cst = arith.constant dense<0.000000e+00> : vector<504x128xf32>
    %2 = tpu.matmul %0, %1, %cst {dimension_numbers = #tpu.dot_dimension_numbers<[1], [0], [0], [1], [0, 0, 1, 1], [], []>} : vector<504x32xf32>, vector<32x128xf32>, vector<504x128xf32> -> vector<504x128xf32>
    %c0_3 = arith.constant 0 : index
    %c0_4 = arith.constant 0 : index
    %3 = vector.load %arg3[%c0_3, %c0_4] : memref<1x128xf32, #tpu.memory_space<vmem>>, vector<1x128xf32>
    %4 = vector.broadcast %3 : vector<1x128xf32> to vector<504x128xf32>
    %5 = arith.addf %2, %4 : vector<504x128xf32>
    %cst_5 = arith.constant 0.000000e+00 : f32
    %6 = vector.broadcast %cst_5 : f32 to vector<504x128xf32>
    %7 = arith.maximumf %5, %6 : vector<504x128xf32>
    %c0_6 = arith.constant 0 : index
    %c0_7 = arith.constant 0 : index
    %8 = vector.load %arg4[%c0_6, %c0_7] : memref<128x16xf32, #tpu.memory_space<vmem>>, vector<128x16xf32>
    %cst_8 = arith.constant dense<0.000000e+00> : vector<504x16xf32>
    %9 = tpu.matmul %7, %8, %cst_8 {dimension_numbers = #tpu.dot_dimension_numbers<[1], [0], [0], [1], [0, 0, 1, 1], [], []>} : vector<504x128xf32>, vector<128x16xf32>, vector<504x16xf32> -> vector<504x16xf32>
    %c0_9 = arith.constant 0 : index
    %c0_10 = arith.constant 0 : index
    %10 = vector.load %arg5[%c0_9, %c0_10] : memref<1x16xf32, #tpu.memory_space<vmem>>, vector<1x16xf32>
    %11 = vector.broadcast %10 : vector<1x16xf32> to vector<504x16xf32>
    %12 = arith.addf %9, %11 : vector<504x16xf32>
    %c0_11 = arith.constant 0 : index
    %c0_12 = arith.constant 0 : index
    %13 = vector.load %arg6[%c0_11, %c0_12] : memref<504x16xf32, #tpu.memory_space<vmem>>, vector<504x16xf32>
    tpu.vector_store %arg6[%c0_11, %c0_12], %12 {strides = array<i32>} : memref<504x16xf32, #tpu.memory_space<vmem>>, vector<504x16xf32>,
    return
  }
  func.func @transform_0(%arg0: i32) -> (i32, i32) {
    %c0_i32 = arith.constant 0 : i32
    %c0_i32_0 = arith.constant 0 : i32
    return %arg0, %c0_i32 : i32, i32
  }
  func.func @transform_1(%arg0: i32) -> (i32, i32) {
    %c0_i32 = arith.constant 0 : i32
    %c0_i32_0 = arith.constant 0 : i32
    %c0_i32_1 = arith.constant 0 : i32
    return %c0_i32, %c0_i32_0 : i32, i32
  }
  func.func @transform_2(%arg0: i32) -> (i32, i32) {
    %c0_i32 = arith.constant 0 : i32
    %c0_i32_0 = arith.constant 0 : i32
    %c0_i32_1 = arith.constant 0 : i32
    return %c0_i32, %c0_i32_0 : i32, i32
  }
  func.func @transform_3(%arg0: i32) -> (i32, i32) {
    %c0_i32 = arith.constant 0 : i32
    %c0_i32_0 = arith.constant 0 : i32
    %c0_i32_1 = arith.constant 0 : i32
    return %c0_i32, %c0_i32_0 : i32, i32
  }
  func.func @transform_4(%arg0: i32) -> (i32, i32) {
    %c0_i32 = arith.constant 0 : i32
    %c0_i32_0 = arith.constant 0 : i32
    %c0_i32_1 = arith.constant 0 : i32
    return %c0_i32, %c0_i32_0 : i32, i32
  }
  func.func @transform_5(%arg0: i32) -> (i32, i32) {
    %c0_i32 = arith.constant 0 : i32
    %c0_i32_0 = arith.constant 0 : i32
    return %arg0, %c0_i32 : i32, i32
  }
}

</mosaic_0001>

<llo_original>
// kernel: mlp_forward.1
$region0: #{mlp_forward.1}
  #allocation0 [shape = 'u32[]', space=smem, size = 0x4, offset = 0x4, fixed_abs, tag = 'smem constant byte address 0x4 - core index']
  #allocation1 [shape = 'u32[144,128]{1,0:T(1,128)}', space=vmem, size = 0x12000, scoped, tag = 'internal scratch']
  %s0 = inlined_call_operand.vmem [shape: f32[1000,32], index: 0, kind: input, shape index: {}]
  %s1 = inlined_call_operand.vmem [shape: f32[32,128], index: 1, kind: input, shape index: {}]
  %s2 = inlined_call_operand.vmem [shape: f32[1,128], index: 2, kind: input, shape index: {}]
  %s3 = inlined_call_operand.vmem [shape: f32[128,16], index: 3, kind: input, shape index: {}]
  %s4 = inlined_call_operand.vmem [shape: f32[1,16], index: 4, kind: input, shape index: {}]
  %s5 = inlined_call_operand.vmem [shape: f32[1000,16], index: 5, kind: output, shape index: {}]
  %s6 = sld [smem:[#allocation0]]
  $region101: #{mlp_forward.1} parent=0
    _
  %s8 = ssub.s32 1, %s6
  %s9 = scalar_select 0, %s8, %s6
  $region1: #{mlp_forward.1} parent=0
    #allocation2 [shape = 'u8[516096]{0}', space=vmem, size = 0x7e000, scoped, tag = 'output window, operand 0']
    loop: start=0, step=1, limit=4
    $region2: #{mlp_forward.1} parent=1 // loop_pre_header
      _
    $region3: #{mlp_forward.1} parent=1 // loop_header
      %s11 = sphi 0, %s15
      %p12 = scmp.ge.s32.totalorder %s11, 4
      %s21 = sphi 0, %s23
      %s24 = sphi 0, %s21
      %s25 = sphi 0, %s24
      %s41 = sphi 0, %s25
      %s45 = sphi 0, %s45
      %s47 = sphi 0, %s45
      %s48 = sphi 0, %s47
      %s62 = sphi 0, %s48
      %s66 = sphi 0, %s66
      %s68 = sphi 0, %s66
      %s69 = sphi 0, %s68
      %s83 = sphi 0, %s69
      %s87 = sphi 0, %s87
      %s89 = sphi 0, %s87
      %s90 = sphi 0, %s89
      %s104 = sphi 0, %s90
      %s108 = sphi 0, %s108
      %s110 = sphi 0, %s108
      %s111 = sphi 0, %s110
      %s125 = sphi 0, %s111
      %s131 = sphi 0, %s133
      %s134 = sphi 0, %s131
      %s135 = sphi 0, %s134
      %s151 = sphi 0, %s135
    $region4: #{mlp_forward.1} parent=1 // loop_header_branch
      %14 = sbr.rel (%p12) target = $region8
    $region5: #{mlp_forward.1} parent=1 // loop_body
      %s16 = ssub.s32 %s11, 1
      %s17 = ssub.s32 %s11, 2
      %s18 = sadd.s32 %s11, 1
      %s19 = ssub.s32 %s11, %s18
      %p20 = scmp.eq.s32.totalorder %s19, 0
      %s22 = sadd.s32 %s21, 1
      %s23 = scalar_select %p20, %s21, %s22
      %p26 = pneg %p20
      %p27 = scmp.eq.s32.totalorder %s11, 1
      %p28 = por %p26, %p27
      %p29 = scmp.ne.s32.totalorder %s21, %s24
      %p30 = scmp.eq.s32.totalorder %s11, 0
      %p31 = por %p29, %p30
      %p32 = scmp.ne.s32.totalorder %s21, %s24
      %p33 = scmp.eq.s32.totalorder %s16, 1
      %p34 = por %p32, %p33
      %p35 = scmp.ne.s32.totalorder %s24, %s25
      %p36 = scmp.eq.s32.totalorder %s16, 0
      %p37 = por %p35, %p36
      %p38 = scmp.ne.s32.totalorder %s24, %s25
      %p39 = scmp.eq.s32.totalorder %s17, 1
      %p40 = por %p38, %p39
      %p42 = scmp.ne.s32.totalorder %s25, %s41
      %p43 = scmp.eq.s32.totalorder %s17, 0
      %p44 = por %p42, %p43
      %s46 = sadd.s32 %s45, 1
      %p49 = scmp.eq.s32.totalorder %s11, 1
      %p50 = scmp.ne.s32.totalorder %s45, %s47
      %p51 = scmp.eq.s32.totalorder %s11, 0
      %p52 = por %p50, %p51
      %p53 = scmp.ne.s32.totalorder %s45, %s47
      %p54 = scmp.eq.s32.totalorder %s16, 1
      %p55 = por %p53, %p54
      %p56 = scmp.ne.s32.totalorder %s47, %s48
      %p57 = scmp.eq.s32.totalorder %s16, 0
      %p58 = por %p56, %p57
      %p59 = scmp.ne.s32.totalorder %s47, %s48
      %p60 = scmp.eq.s32.totalorder %s17, 1
      %p61 = por %p59, %p60
      %p63 = scmp.ne.s32.totalorder %s48, %s62
      %p64 = scmp.eq.s32.totalorder %s17, 0
      %p65 = por %p63, %p64
      %s67 = sadd.s32 %s66, 1
      %p70 = scmp.eq.s32.totalorder %s11, 1
      %p71 = scmp.ne.s32.totalorder %s66, %s68
      %p72 = scmp.eq.s32.totalorder %s11, 0
      %p73 = por %p71, %p72
      %p74 = scmp.ne.s32.totalorder %s66, %s68
      %p75 = scmp.eq.s32.totalorder %s16, 1
      %p76 = por %p74, %p75
      %p77 = scmp.ne.s32.totalorder %s68, %s69
      %p78 = scmp.eq.s32.totalorder %s16, 0
      %p79 = por %p77, %p78
      %p80 = scmp.ne.s32.totalorder %s68, %s69
      %p81 = scmp.eq.s32.totalorder %s17, 1
      %p82 = por %p80, %p81
      %p84 = scmp.ne.s32.totalorder %s69, %s83
      %p85 = scmp.eq.s32.totalorder %s17, 0
      %p86 = por %p84, %p85
      %s88 = sadd.s32 %s87, 1
      %p91 = scmp.eq.s32.totalorder %s11, 1
      %p92 = scmp.ne.s32.totalorder %s87, %s89
      %p93 = scmp.eq.s32.totalorder %s11, 0
      %p94 = por %p92, %p93
      %p95 = scmp.ne.s32.totalorder %s87, %s89
      %p96 = scmp.eq.s32.totalorder %s16, 1
      %p97 = por %p95, %p96
      %p98 = scmp.ne.s32.totalorder %s89, %s90
      %p99 = scmp.eq.s32.totalorder %s16, 0
      %p100 = por %p98, %p99
      %p101 = scmp.ne.s32.totalorder %s89, %s90
      %p102 = scmp.eq.s32.totalorder %s17, 1
      %p103 = por %p101, %p102
      %p105 = scmp.ne.s32.totalorder %s90, %s104
      %p106 = scmp.eq.s32.totalorder %s17, 0
      %p107 = por %p105, %p106
      %s109 = sadd.s32 %s108, 1
      %p112 = scmp.eq.s32.totalorder %s11, 1
      %p113 = scmp.ne.s32.totalorder %s108, %s110
      %p114 = scmp.eq.s32.totalorder %s11, 0
      %p115 = por %p113, %p114
      %p116 = scmp.ne.s32.totalorder %s108, %s110
      %p117 = scmp.eq.s32.totalorder %s16, 1
      %p118 = por %p116, %p117
      %p119 = scmp.ne.s32.totalorder %s110, %s111
      %p120 = scmp.eq.s32.totalorder %s16, 0
      %p121 = por %p119, %p120
      %p122 = scmp.ne.s32.totalorder %s110, %s111
      %p123 = scmp.eq.s32.totalorder %s17, 1
      %p124 = por %p122, %p123
      %p126 = scmp.ne.s32.totalorder %s111, %s125
      %p127 = scmp.eq.s32.totalorder %s17, 0
      %p128 = por %p126, %p127
      %s129 = ssub.s32 %s11, %s18
      %p130 = scmp.eq.s32.totalorder %s129, 0
      %s132 = sadd.s32 %s131, 1
      %s133 = scalar_select %p130, %s131, %s132
      %p136 = pneg %p130
      %p137 = scmp.eq.s32.totalorder %s11, 1
      %p138 = por %p136, %p137
      %p139 = scmp.ne.s32.totalorder %s131, %s134
      %p140 = scmp.eq.s32.totalorder %s11, 0
      %p141 = por %p139, %p140
      %p142 = scmp.ne.s32.totalorder %s131, %s134
      %p143 = scmp.eq.s32.totalorder %s16, 1
      %p144 = por %p142, %p143
      %p145 = scmp.ne.s32.totalorder %s134, %s135
      %p146 = scmp.eq.s32.totalorder %s16, 0
      %p147 = por %p145, %p146
      %p148 = scmp.ne.s32.totalorder %s134, %s135
      %p149 = scmp.eq.s32.totalorder %s17, 1
      %p150 = por %p148, %p149
      %p152 = scmp.ne.s32.totalorder %s135, %s151
      %p153 = scmp.eq.s32.totalorder %s17, 0
      %p154 = por %p152, %p153
      %p155 = scmp.le.s32.totalorder 1, %s11
      %p156 = scmp.lt.s32.totalorder %s11, 3
      %p157 = pnand %p155, %p156
      %p158 = pneg %p157
      // Predicated region
      $region9: #{mlp_forward.1} parent=5 // pred_check
        _
      $region10: #{mlp_forward.1} parent=5 // pred_check_branch
        %160 = sbr.rel (%p157) target = $region12
      $region11: #{mlp_forward.1} parent=5 // pred_region
        %s161 = ssub.s32 %s11, 1
        // Predicated region
        $region13: #{mlp_forward.1} parent=11 // pred_check
          %p162 = pneg %p58
        $region14: #{mlp_forward.1} parent=11 // pred_check_branch
          %164 = sbr.rel (%p162) target = $region16
        $region15: #{mlp_forward.1} parent=11 // pred_region
          _
        $region16: #{mlp_forward.1} parent=11 // pred_fallthru
          _
        // Predicated region
        $region17: #{mlp_forward.1} parent=11 // pred_check
          %p165 = pneg %p79
        $region18: #{mlp_forward.1} parent=11 // pred_check_branch
          %167 = sbr.rel (%p165) target = $region20
        $region19: #{mlp_forward.1} parent=11 // pred_region
          _
        $region20: #{mlp_forward.1} parent=11 // pred_fallthru
          _
        // Predicated region
        $region21: #{mlp_forward.1} parent=11 // pred_check
          %p168 = pneg %p100
        $region22: #{mlp_forward.1} parent=11 // pred_check_branch
          %170 = sbr.rel (%p168) target = $region24
        $region23: #{mlp_forward.1} parent=11 // pred_region
          _
        $region24: #{mlp_forward.1} parent=11 // pred_fallthru
          _
        // Predicated region
        $region25: #{mlp_forward.1} parent=11 // pred_check
          %p171 = pneg %p121
        $region26: #{mlp_forward.1} parent=11 // pred_check_branch
          %173 = sbr.rel (%p171) target = $region28
        $region27: #{mlp_forward.1} parent=11 // pred_region
          _
        $region28: #{mlp_forward.1} parent=11 // pred_fallthru
          _
      $region12: #{mlp_forward.1} parent=5 // pred_fallthru
        _
      %p174 = scmp.lt.s32.totalorder %s11, 2
      // Predicated region
      $region29: #{mlp_forward.1} parent=5 // pred_check
        %p175 = pneg %p174
      $region30: #{mlp_forward.1} parent=5 // pred_check_branch
        %177 = sbr.rel (%p175) target = $region32
      $region31: #{mlp_forward.1} parent=5 // pred_region
        // Predicated region
        $region33: #{mlp_forward.1} parent=31 // pred_check
          %p178 = pneg %p31
        $region34: #{mlp_forward.1} parent=31 // pred_check_branch
          %180 = sbr.rel (%p178) target = $region36
        $region35: #{mlp_forward.1} parent=31 // pred_region
          %s181 = smul.u32 63, %s11
          %s182 = ssub.s32 125, %s181
          %p183 = scmp.lt.s32.totalorder %s182, 63
          %s184 = scalar_select %p183, %s182, 63
          %s185 = smul.u32 128, %s184
          %p186 = scmp.lt.s32.totalorder %s181, 124
          %s187 = scalar_select %p186, %s181, 124
          %s188 = smul.addr %s187, 8
          %s189 = scalar_lea.vmem %s0, %s188
          %s190 = smul.u32 63, %s11
          %s191 = ssub.s32 125, %s190
          %p192 = scmp.lt.s32.totalorder %s191, 63
          %s193 = scalar_select %p192, %s191, 63
          %s194 = smul.u32 128, %s193
        $region36: #{mlp_forward.1} parent=31 // pred_fallthru
          _
      $region32: #{mlp_forward.1} parent=5 // pred_fallthru
        _
      %p195 = scmp.le.s32.totalorder 1, %s11
      %p196 = scmp.lt.s32.totalorder %s11, 3
      %p197 = pnand %p195, %p196
      %p198 = pneg %p197
      // Predicated region
      $region37: #{mlp_forward.1} parent=5 // pred_check
        _
      $region38: #{mlp_forward.1} parent=5 // pred_check_branch
        %200 = sbr.rel (%p197) target = $region40
      $region39: #{mlp_forward.1} parent=5 // pred_region
        %s201 = ssub.s32 %s11, 1
        %s202 = smul.u32 63, %s16
        %s203 = ssub.s32 125, %s202
        %p204 = scmp.lt.s32.totalorder %s203, 63
        %s205 = scalar_select %p204, %s203, 63
        %s206 = smul.u32 128, %s205
        %p207 = scmp.lt.s32.totalorder %s202, 124
        %s208 = scalar_select %p207, %s202, 124
        %s209 = smul.addr %s208, 8
        %s210 = scalar_lea.vmem %s0, %s209
        %p211 = pneg %p37
        %p212 = pneg %p34
        %p213 = pneg %p58
        %p214 = pneg %p55
        %p215 = pneg %p79
        %p216 = pneg %p76
        %p217 = pneg %p100
        %p218 = pneg %p97
        %p219 = pneg %p121
        %p220 = pneg %p118
        %p221 = pneg %p147
        %p222 = pneg %p144
        %s223 = sand.u32 %s134, 1
        %s224 = sand.u32 %s134, 1
        %s225 = smul.addr %s224, 504
        %s226 = scalar_lea.vmem [#allocation2], %s225
        %s227 = smul.u32 63, %s16
        %s228 = ssub.s32 125, %s227
        %p229 = scmp.lt.s32.totalorder %s228, 63
        %s230 = scalar_select %p229, %s228, 63
        %s231 = smul.u32 128, %s230
        %p232 = scmp.lt.s32.totalorder %s227, 124
        %s233 = scalar_select %p232, %s227, 124
        %s234 = smul.addr %s233, 8
        %s235 = scalar_lea.vmem %s0, %s234
        %s236 = smul.u32 63, %s16
        %s237 = ssub.s32 125, %s236
        %p238 = scmp.lt.s32.totalorder %s237, 63
        %s239 = scalar_select %p238, %s237, 63
        %s240 = smul.u32 128, %s239
        %s241 = smul.u32 63, %s16
        %s242 = ssub.s32 125, %s241
        %p243 = scmp.lt.s32.totalorder %s242, 63
        %s244 = scalar_select %p243, %s242, 63
        %s245 = smul.u32 128, %s244
        %v246 = vld [vmem:[%s235] sm:$0xff]
        %v247 = vld [vmem:[%s235 + $0x8] sm:$0xff]
        %v248 = vld [vmem:[%s235 + $0x10] sm:$0xff]
        %v249 = vld [vmem:[%s235 + $0x18] sm:$0xff]
        %v250 = vld [vmem:[%s235 + $0x20] sm:$0xff]
        %v251 = vld [vmem:[%s235 + $0x28] sm:$0xff]
        %v252 = vld [vmem:[%s235 + $0x30] sm:$0xff]
        %v253 = vld [vmem:[%s235 + $0x38] sm:$0xff]
        %v254 = vld [vmem:[%s235 + $0x40] sm:$0xff]
        %v255 = vld [vmem:[%s235 + $0x48] sm:$0xff]
        %v256 = vld [vmem:[%s235 + $0x50] sm:$0xff]
        %v257 = vld [vmem:[%s235 + $0x58] sm:$0xff]
        %v258 = vld [vmem:[%s235 + $0x60] sm:$0xff]
        %v259 = vld [vmem:[%s235 + $0x68] sm:$0xff]
        %v260 = vld [vmem:[%s235 + $0x70] sm:$0xff]
        %v261 = vld [vmem:[%s235 + $0x78] sm:$0xff]
        %v262 = vld [vmem:[%s235 + $0x80] sm:$0xff]
        %v263 = vld [vmem:[%s235 + $0x88] sm:$0xff]
        %v264 = vld [vmem:[%s235 + $0x90] sm:$0xff]
        %v265 = vld [vmem:[%s235 + $0x98] sm:$0xff]
        %v266 = vld [vmem:[%s235 + $0xa0] sm:$0xff]
        %v267 = vld [vmem:[%s235 + $0xa8] sm:$0xff]
        %v268 = vld [vmem:[%s235 + $0xb0] sm:$0xff]
        %v269 = vld [vmem:[%s235 + $0xb8] sm:$0xff]
        %v270 = vld [vmem:[%s235 + $0xc0] sm:$0xff]
        %v271 = vld [vmem:[%s235 + $0xc8] sm:$0xff]
        %v272 = vld [vmem:[%s235 + $0xd0] sm:$0xff]
        %v273 = vld [vmem:[%s235 + $0xd8] sm:$0xff]
        %v274 = vld [vmem:[%s235 + $0xe0] sm:$0xff]
        %v275 = vld [vmem:[%s235 + $0xe8] sm:$0xff]
        %v276 = vld [vmem:[%s235 + $0xf0] sm:$0xff]
        %v277 = vld [vmem:[%s235 + $0xf8] sm:$0xff]
        %v278 = vld [vmem:[%s235 + $0x100] sm:$0xff]
        %v279 = vld [vmem:[%s235 + $0x108] sm:$0xff]
        %v280 = vld [vmem:[%s235 + $0x110] sm:$0xff]
        %v281 = vld [vmem:[%s235 + $0x118] sm:$0xff]
        %v282 = vld [vmem:[%s235 + $0x120] sm:$0xff]
        %v283 = vld [vmem:[%s235 + $0x128] sm:$0xff]
        %v284 = vld [vmem:[%s235 + $0x130] sm:$0xff]
        %v285 = vld [vmem:[%s235 + $0x138] sm:$0xff]
        %v286 = vld [vmem:[%s235 + $0x140] sm:$0xff]
        %v287 = vld [vmem:[%s235 + $0x148] sm:$0xff]
        %v288 = vld [vmem:[%s235 + $0x150] sm:$0xff]
        %v289 = vld [vmem:[%s235 + $0x158] sm:$0xff]
        %v290 = vld [vmem:[%s235 + $0x160] sm:$0xff]
        %v291 = vld [vmem:[%s235 + $0x168] sm:$0xff]
        %v292 = vld [vmem:[%s235 + $0x170] sm:$0xff]
        %v293 = vld [vmem:[%s235 + $0x178] sm:$0xff]
        %v294 = vld [vmem:[%s235 + $0x180] sm:$0xff]
        %v295 = vld [vmem:[%s235 + $0x188] sm:$0xff]
        %v296 = vld [vmem:[%s235 + $0x190] sm:$0xff]
        %v297 = vld [vmem:[%s235 + $0x198] sm:$0xff]
        %v298 = vld [vmem:[%s235 + $0x1a0] sm:$0xff]
        %v299 = vld [vmem:[%s235 + $0x1a8] sm:$0xff]
        %v300 = vld [vmem:[%s235 + $0x1b0] sm:$0xff]
        %v301 = vld [vmem:[%s235 + $0x1b8] sm:$0xff]
        %v302 = vld [vmem:[%s235 + $0x1c0] sm:$0xff]
        %v303 = vld [vmem:[%s235 + $0x1c8] sm:$0xff]
        %v304 = vld [vmem:[%s235 + $0x1d0] sm:$0xff]
        %v305 = vld [vmem:[%s235 + $0x1d8] sm:$0xff]
        %v306 = vld [vmem:[%s235 + $0x1e0] sm:$0xff]
        %v307 = vld [vmem:[%s235 + $0x1e8] sm:$0xff]
        %v308 = vld [vmem:[%s235 + $0x1f0] sm:$0xff]
        %v309 = vld [vmem:[%s1] sm:$0xff]
        %v310 = vld [vmem:[%s1 + $0x8] sm:$0xff]
        %v311 = vld [vmem:[%s1 + $0x10] sm:$0xff]
        %v312 = vld [vmem:[%s1 + $0x18] sm:$0xff]
        %v313 = vld [vmem:[%s2] sm:$0x1]
        %v315 = vlaneseq
        %v316 = vshrl.u32 %v315, 7
        %v317 = vsub.s32 0, %v316
        %v318 = vrot.slane %v313, %v317
        %vm320 = vcmask 261120
        %v322 = vsel %vm320, %v246, 0
        %v325 = vsel %vm320, %v247, 0
        %v328 = vsel %vm320, %v248, 0
        %v331 = vsel %vm320, %v249, 0
        %v334 = vsel %vm320, %v250, 0
        %v337 = vsel %vm320, %v251, 0
        %v340 = vsel %vm320, %v252, 0
        %v343 = vsel %vm320, %v253, 0
        %v346 = vsel %vm320, %v254, 0
        %v349 = vsel %vm320, %v255, 0
        %v352 = vsel %vm320, %v256, 0
        %v355 = vsel %vm320, %v257, 0
        %v358 = vsel %vm320, %v258, 0
        %v361 = vsel %vm320, %v259, 0
        %v364 = vsel %vm320, %v260, 0
        %v367 = vsel %vm320, %v261, 0
        %v370 = vsel %vm320, %v262, 0
        %v373 = vsel %vm320, %v263, 0
        %v376 = vsel %vm320, %v264, 0
        %v379 = vsel %vm320, %v265, 0
        %v382 = vsel %vm320, %v266, 0
        %v385 = vsel %vm320, %v267, 0
        %v388 = vsel %vm320, %v268, 0
        %v391 = vsel %vm320, %v269, 0
        %v394 = vsel %vm320, %v270, 0
        %v397 = vsel %vm320, %v271, 0
        %v400 = vsel %vm320, %v272, 0
        %v403 = vsel %vm320, %v273, 0
        %v406 = vsel %vm320, %v274, 0
        %v409 = vsel %vm320, %v275, 0
        %v412 = vsel %vm320, %v276, 0
        %v415 = vsel %vm320, %v277, 0
        %v418 = vsel %vm320, %v278, 0
        %v421 = vsel %vm320, %v279, 0
        %v424 = vsel %vm320, %v280, 0
        %v427 = vsel %vm320, %v281, 0
        %v430 = vsel %vm320, %v282, 0
        %v433 = vsel %vm320, %v283, 0
        %v436 = vsel %vm320, %v284, 0
        %v439 = vsel %vm320, %v285, 0
        %v442 = vsel %vm320, %v286, 0
        %v445 = vsel %vm320, %v287, 0
        %v448 = vsel %vm320, %v288, 0
        %v451 = vsel %vm320, %v289, 0
        %v454 = vsel %vm320, %v290, 0
        %v457 = vsel %vm320, %v291, 0
        %v460 = vsel %vm320, %v292, 0
        %v463 = vsel %vm320, %v293, 0
        %v466 = vsel %vm320, %v294, 0
        %v469 = vsel %vm320, %v295, 0
        %v472 = vsel %vm320, %v296, 0
        %v475 = vsel %vm320, %v297, 0
        %v478 = vsel %vm320, %v298, 0
        %v481 = vsel %vm320, %v299, 0
        %v484 = vsel %vm320, %v300, 0
        %v487 = vsel %vm320, %v301, 0
        %v490 = vsel %vm320, %v302, 0
        %v493 = vsel %vm320, %v303, 0
        %v496 = vsel %vm320, %v304, 0
        %v499 = vsel %vm320, %v305, 0
        %v502 = vsel %vm320, %v306, 0
        %v505 = vsel %vm320, %v307, 0
        %v508 = vsel %vm320, %v308, 0
        %510 = vmatprep.subr.mxu0 0.0
        %511 = vmatpush1.msra.mxu0 %v309
        %512 = vmatprep.subr.mxu0 0.0
        %513 = vmatpush1.msra.mxu0 %v310
        %514 = vmatprep.subr.mxu0 0.0
        %515 = vmatpush1.msra.mxu0 %v311
        %516 = vmatprep.subr.mxu0 0.0
        %517 = vmatpush1.msra.mxu0 %v312
        %518 = vmatprep.subr.mxu0 0.0
        %519 = vmatpush1.msra.mxu0 0.0
        %520 = vmatprep.subr.mxu0 0.0
        %521 = vmatpush1.msra.mxu0 0.0
        %522 = vmatprep.subr.mxu0 0.0
        %523 = vmatpush1.msra.mxu0 0.0
        %524 = vmatprep.subr.mxu0 0.0
        %525 = vmatpush1.msra.mxu0 0.0
        %526 = vmatprep.subr.mxu0 0.0
        %527 = vmatpush1.msra.mxu0 0.0
        %528 = vmatprep.subr.mxu0 0.0
        %529 = vmatpush1.msra.mxu0 0.0
        %530 = vmatprep.subr.mxu0 0.0
        %531 = vmatpush1.msra.mxu0 0.0
        %532 = vmatprep.subr.mxu0 0.0
        %533 = vmatpush1.msra.mxu0 0.0
        %534 = vmatprep.subr.mxu0 0.0
        %535 = vmatpush1.msra.mxu0 0.0
        %536 = vmatprep.subr.mxu0 0.0
        %537 = vmatpush1.msra.mxu0 0.0
        %538 = vmatprep.subr.mxu0 0.0
        %539 = vmatpush1.msra.mxu0 0.0
        %540 = vmatprep.subr.mxu0 0.0
        %541 = vmatpush1.msra.mxu0 0.0
        %542 = vmatprep.subr.mxu0 0.0
        %543 = vmatpush1.msra.mxu0 0.0
        %544 = vmatprep.subr.mxu0 0.0
        %545 = vmatpush1.msra.mxu0 0.0
        %546 = vmatprep.subr.mxu0 0.0
        %547 = vmatpush1.msra.mxu0 0.0
        %548 = vmatprep.subr.mxu0 0.0
        %549 = vmatpush1.msra.mxu0 0.0
        %550 = vmatprep.subr.mxu0 0.0
        %551 = vmatpush1.msra.mxu0 0.0
        %552 = vmatprep.subr.mxu0 0.0
        %553 = vmatpush1.msra.mxu0 0.0
        %554 = vmatprep.subr.mxu0 0.0
        %555 = vmatpush1.msra.mxu0 0.0
        %556 = vmatprep.subr.mxu0 0.0
        %557 = vmatpush1.msra.mxu0 0.0
        %558 = vmatprep.subr.mxu0 0.0
        %559 = vmatpush1.msra.mxu0 0.0
        %560 = vmatprep.subr.mxu0 0.0
        %561 = vmatpush1.msra.mxu0 0.0
        %562 = vmatprep.subr.mxu0 0.0
        %563 = vmatpush1.msra.mxu0 0.0
        %564 = vmatprep.subr.mxu0 0.0
        %565 = vmatpush1.msra.mxu0 0.0
        %566 = vmatprep.subr.mxu0 0.0
        %567 = vmatpush1.msra.mxu0 0.0
        %568 = vmatprep.subr.mxu0 0.0
        %569 = vmatpush1.msra.mxu0 0.0
        %570 = vmatprep.subr.mxu0 0.0
        %571 = vmatpush1.msra.mxu0 0.0
        %572 = vmatprep.subr.mxu0 0.0
        %573 = vmatpush1.msra.mxu0 0.0
        %574 = vmatprep.mubr.f32.mxu0 0.0
        %575 = vmatmul.mubr.f32.gmra.mrb[0].mxu0 %v322
        %v576 = vpop.f32.mrb[0].mxu0
        %v577 = vadd.f32 %v318, %v576
        %v578 = vpop.f32.mrb[0].mxu0
        %579 = vmatprep.mubr.f32.mxu0 0.0
        %580 = vmatmul.mubr.f32.gmra.mrb[0].mxu0 %v325
        %v581 = vpop.f32.mrb[0].mxu0
        %v582 = vadd.f32 %v318, %v581
        %v583 = vpop.f32.mrb[0].mxu0
        %584 = vmatprep.mubr.f32.mxu0 0.0
        %585 = vmatmul.mubr.f32.gmra.mrb[0].mxu0 %v328
        %v586 = vpop.f32.mrb[0].mxu0
        %v587 = vadd.f32 %v318, %v586
        %v588 = vpop.f32.mrb[0].mxu0
        %589 = vmatprep.mubr.f32.mxu0 0.0
        %590 = vmatmul.mubr.f32.gmra.mrb[0].mxu0 %v331
        %v591 = vpop.f32.mrb[0].mxu0
        %v592 = vadd.f32 %v318, %v591
        %v593 = vpop.f32.mrb[0].mxu0
        %594 = vmatprep.mubr.f32.mxu0 0.0
        %595 = vmatmul.mubr.f32.gmra.mrb[0].mxu0 %v334
        %v596 = vpop.f32.mrb[0].mxu0
        %v597 = vadd.f32 %v318, %v596
        %v598 = vpop.f32.mrb[0].mxu0
        %599 = vmatprep.mubr.f32.mxu0 0.0
        %600 = vmatmul.mubr.f32.gmra.mrb[0].mxu0 %v337
        %v601 = vpop.f32.mrb[0].mxu0
        %v602 = vadd.f32 %v318, %v601
        %v603 = vpop.f32.mrb[0].mxu0
        %604 = vmatprep.mubr.f32.mxu0 0.0
        %605 = vmatmul.mubr.f32.gmra.mrb[0].mxu0 %v340
        %v606 = vpop.f32.mrb[0].mxu0
        %v607 = vadd.f32 %v318, %v606
        %v608 = vpop.f32.mrb[0].mxu0
        %609 = vmatprep.mubr.f32.mxu0 0.0
        %610 = vmatmul.mubr.f32.gmra.mrb[0].mxu0 %v343
        %v611 = vpop.f32.mrb[0].mxu0
        %v612 = vadd.f32 %v318, %v611
        %v613 = vpop.f32.mrb[0].mxu0
        %614 = vmatprep.mubr.f32.mxu0 0.0
        %615 = vmatmul.mubr.f32.gmra.mrb[0].mxu0 %v346
        %v616 = vpop.f32.mrb[0].mxu0
        %v617 = vadd.f32 %v318, %v616
        %v618 = vpop.f32.mrb[0].mxu0
        %619 = vmatprep.mubr.f32.mxu0 0.0
        %620 = vmatmul.mubr.f32.gmra.mrb[0].mxu0 %v349
        %v621 = vpop.f32.mrb[0].mxu0
        %v622 = vadd.f32 %v318, %v621
        %v623 = vpop.f32.mrb[0].mxu0
        %624 = vmatprep.mubr.f32.mxu0 0.0
        %625 = vmatmul.mubr.f32.gmra.mrb[0].mxu0 %v352
        %v626 = vpop.f32.mrb[0].mxu0
        %v627 = vadd.f32 %v318, %v626
        %v628 = vpop.f32.mrb[0].mxu0
        %629 = vmatprep.mubr.f32.mxu0 0.0
        %630 = vmatmul.mubr.f32.gmra.mrb[0].mxu0 %v355
        %v631 = vpop.f32.mrb[0].mxu0
        %v632 = vadd.f32 %v318, %v631
        %v633 = vpop.f32.mrb[0].mxu0
        %634 = vmatprep.mubr.f32.mxu0 0.0
        %635 = vmatmul.mubr.f32.gmra.mrb[0].mxu0 %v358
        %v636 = vpop.f32.mrb[0].mxu0
        %v637 = vadd.f32 %v318, %v636
        %v638 = vpop.f32.mrb[0].mxu0
        %639 = vmatprep.mubr.f32.mxu0 0.0
        %640 = vmatmul.mubr.f32.gmra.mrb[0].mxu0 %v361
        %v641 = vpop.f32.mrb[0].mxu0
        %v642 = vadd.f32 %v318, %v641
        %v643 = vpop.f32.mrb[0].mxu0
        %644 = vmatprep.mubr.f32.mxu0 0.0
        %645 = vmatmul.mubr.f32.gmra.mrb[0].mxu0 %v364
        %v646 = vpop.f32.mrb[0].mxu0
        %v647 = vadd.f32 %v318, %v646
        %v648 = vpop.f32.mrb[0].mxu0
        %649 = vmatprep.mubr.f32.mxu0 0.0
        %650 = vmatmul.mubr.f32.gmra.mrb[0].mxu0 %v367
        %v651 = vpop.f32.mrb[0].mxu0
        %v652 = vadd.f32 %v318, %v651
        %v653 = vpop.f32.mrb[0].mxu0
        %654 = vmatprep.mubr.f32.mxu0 0.0
        %655 = vmatmul.mubr.f32.gmra.mrb[0].mxu0 %v370
        %v656 = vpop.f32.mrb[0].mxu0
        %v657 = vadd.f32 %v318, %v656
        %v658 = vpop.f32.mrb[0].mxu0
        %659 = vmatprep.mubr.f32.mxu0 0.0
        %660 = vmatmul.mubr.f32.gmra.mrb[0].mxu0 %v373
        %v661 = vpop.f32.mrb[0].mxu0
        %v662 = vadd.f32 %v318, %v661
        %v663 = vpop.f32.mrb[0].mxu0
        %664 = vmatprep.mubr.f32.mxu0 0.0
        %665 = vmatmul.mubr.f32.gmra.mrb[0].mxu0 %v376
        %v666 = vpop.f32.mrb[0].mxu0
        %v667 = vadd.f32 %v318, %v666
        %v668 = vpop.f32.mrb[0].mxu0
        %669 = vmatprep.mubr.f32.mxu0 0.0
        %670 = vmatmul.mubr.f32.gmra.mrb[0].mxu0 %v379
        %v671 = vpop.f32.mrb[0].mxu0
        %v672 = vadd.f32 %v318, %v671
        %v673 = vpop.f32.mrb[0].mxu0
        %674 = vmatprep.mubr.f32.mxu0 0.0
        %675 = vmatmul.mubr.f32.gmra.mrb[0].mxu0 %v382
        %v676 = vpop.f32.mrb[0].mxu0
        %v677 = vadd.f32 %v318, %v676
        %v678 = vpop.f32.mrb[0].mxu0
        %679 = vmatprep.mubr.f32.mxu0 0.0
        %680 = vmatmul.mubr.f32.gmra.mrb[0].mxu0 %v385
        %v681 = vpop.f32.mrb[0].mxu0
        %v682 = vadd.f32 %v318, %v681
        %v683 = vpop.f32.mrb[0].mxu0
        %684 = vmatprep.mubr.f32.mxu0 0.0
        %685 = vmatmul.mubr.f32.gmra.mrb[0].mxu0 %v388
        %v686 = vpop.f32.mrb[0].mxu0
        %v687 = vadd.f32 %v318, %v686
        %v688 = vpop.f32.mrb[0].mxu0
        %689 = vmatprep.mubr.f32.mxu0 0.0
        %690 = vmatmul.mubr.f32.gmra.mrb[0].mxu0 %v391
        %v691 = vpop.f32.mrb[0].mxu0
        %v692 = vadd.f32 %v318, %v691
        %v693 = vpop.f32.mrb[0].mxu0
        %694 = vmatprep.mubr.f32.mxu0 0.0
        %695 = vmatmul.mubr.f32.gmra.mrb[0].mxu0 %v394
        %v696 = vpop.f32.mrb[0].mxu0
        %v697 = vadd.f32 %v318, %v696
        %v698 = vpop.f32.mrb[0].mxu0
        %699 = vmatprep.mubr.f32.mxu0 0.0
        %700 = vmatmul.mubr.f32.gmra.mrb[0].mxu0 %v397
        %v701 = vpop.f32.mrb[0].mxu0
        %v702 = vadd.f32 %v318, %v701
        %v703 = vpop.f32.mrb[0].mxu0
        %704 = vmatprep.mubr.f32.mxu0 0.0
        %705 = vmatmul.mubr.f32.gmra.mrb[0].mxu0 %v400
        %v706 = vpop.f32.mrb[0].mxu0
        %v707 = vadd.f32 %v318, %v706
        %v708 = vpop.f32.mrb[0].mxu0
        %709 = vmatprep.mubr.f32.mxu0 0.0
        %710 = vmatmul.mubr.f32.gmra.mrb[0].mxu0 %v403
        %v711 = vpop.f32.mrb[0].mxu0
        %v712 = vadd.f32 %v318, %v711
        %v713 = vpop.f32.mrb[0].mxu0
        %714 = vmatprep.mubr.f32.mxu0 0.0
        %715 = vmatmul.mubr.f32.gmra.mrb[0].mxu0 %v406
        %v716 = vpop.f32.mrb[0].mxu0
        %v717 = vadd.f32 %v318, %v716
        %v718 = vpop.f32.mrb[0].mxu0
        %719 = vmatprep.mubr.f32.mxu0 0.0
        %720 = vmatmul.mubr.f32.gmra.mrb[0].mxu0 %v409
        %v721 = vpop.f32.mrb[0].mxu0
        %v722 = vadd.f32 %v318, %v721
        %v723 = vpop.f32.mrb[0].mxu0
        %724 = vmatprep.mubr.f32.mxu0 0.0
        %725 = vmatmul.mubr.f32.gmra.mrb[0].mxu0 %v412
        %v726 = vpop.f32.mrb[0].mxu0
        %v727 = vadd.f32 %v318, %v726
        %v728 = vpop.f32.mrb[0].mxu0
        %729 = vmatprep.mubr.f32.mxu0 0.0
        %730 = vmatmul.mubr.f32.gmra.mrb[0].mxu0 %v415
        %v731 = vpop.f32.mrb[0].mxu0
        %v732 = vadd.f32 %v318, %v731
        %v733 = vpop.f32.mrb[0].mxu0
        %734 = vmatprep.mubr.f32.mxu0 0.0
        %735 = vmatmul.mubr.f32.gmra.mrb[0].mxu0 %v418
        %v736 = vpop.f32.mrb[0].mxu0
        %v737 = vadd.f32 %v318, %v736
        %v738 = vpop.f32.mrb[0].mxu0
        %739 = vmatprep.mubr.f32.mxu0 0.0
        %740 = vmatmul.mubr.f32.gmra.mrb[0].mxu0 %v421
        %v741 = vpop.f32.mrb[0].mxu0
        %v742 = vadd.f32 %v318, %v741
        %v743 = vpop.f32.mrb[0].mxu0
        %744 = vmatprep.mubr.f32.mxu0 0.0
        %745 = vmatmul.mubr.f32.gmra.mrb[0].mxu0 %v424
        %v746 = vpop.f32.mrb[0].mxu0
        %v747 = vadd.f32 %v318, %v746
        %v748 = vpop.f32.mrb[0].mxu0
        %749 = vmatprep.mubr.f32.mxu0 0.0
        %750 = vmatmul.mubr.f32.gmra.mrb[0].mxu0 %v427
        %v751 = vpop.f32.mrb[0].mxu0
        %v752 = vadd.f32 %v318, %v751
        %v753 = vpop.f32.mrb[0].mxu0
        %754 = vmatprep.mubr.f32.mxu0 0.0
        %755 = vmatmul.mubr.f32.gmra.mrb[0].mxu0 %v430
        %v756 = vpop.f32.mrb[0].mxu0
        %v757 = vadd.f32 %v318, %v756
        %v758 = vpop.f32.mrb[0].mxu0
        %759 = vmatprep.mubr.f32.mxu0 0.0
        %760 = vmatmul.mubr.f32.gmra.mrb[0].mxu0 %v433
        %v761 = vpop.f32.mrb[0].mxu0
        %v762 = vadd.f32 %v318, %v761
        %v763 = vpop.f32.mrb[0].mxu0
        %764 = vmatprep.mubr.f32.mxu0 0.0
        %765 = vmatmul.mubr.f32.gmra.mrb[0].mxu0 %v436
        %v766 = vpop.f32.mrb[0].mxu0
        %v767 = vadd.f32 %v318, %v766
        %v768 = vpop.f32.mrb[0].mxu0
        %769 = vmatprep.mubr.f32.mxu0 0.0
        %770 = vmatmul.mubr.f32.gmra.mrb[0].mxu0 %v439
        %v771 = vpop.f32.mrb[0].mxu0
        %v772 = vadd.f32 %v318, %v771
        %v773 = vpop.f32.mrb[0].mxu0
        %774 = vmatprep.mubr.f32.mxu0 0.0
        %775 = vmatmul.mubr.f32.gmra.mrb[0].mxu0 %v442
        %v776 = vpop.f32.mrb[0].mxu0
        %v777 = vadd.f32 %v318, %v776
        %v778 = vpop.f32.mrb[0].mxu0
        %779 = vmatprep.mubr.f32.mxu0 0.0
        %780 = vmatmul.mubr.f32.gmra.mrb[0].mxu0 %v445
        %v781 = vpop.f32.mrb[0].mxu0
        %v782 = vadd.f32 %v318, %v781
        %v783 = vpop.f32.mrb[0].mxu0
        %784 = vmatprep.mubr.f32.mxu0 0.0
        %785 = vmatmul.mubr.f32.gmra.mrb[0].mxu0 %v448
        %v786 = vpop.f32.mrb[0].mxu0
        %v787 = vadd.f32 %v318, %v786
        %v788 = vpop.f32.mrb[0].mxu0
        %789 = vmatprep.mubr.f32.mxu0 0.0
        %790 = vmatmul.mubr.f32.gmra.mrb[0].mxu0 %v451
        %v791 = vpop.f32.mrb[0].mxu0
        %v792 = vadd.f32 %v318, %v791
        %v793 = vpop.f32.mrb[0].mxu0
        %794 = vmatprep.mubr.f32.mxu0 0.0
        %795 = vmatmul.mubr.f32.gmra.mrb[0].mxu0 %v454
        %v796 = vpop.f32.mrb[0].mxu0
        %v797 = vadd.f32 %v318, %v796
        %v798 = vpop.f32.mrb[0].mxu0
        %799 = vmatprep.mubr.f32.mxu0 0.0
        %800 = vmatmul.mubr.f32.gmra.mrb[0].mxu0 %v457
        %v801 = vpop.f32.mrb[0].mxu0
        %v802 = vadd.f32 %v318, %v801
        %v803 = vpop.f32.mrb[0].mxu0
        %804 = vmatprep.mubr.f32.mxu0 0.0
        %805 = vmatmul.mubr.f32.gmra.mrb[0].mxu0 %v460
        %v806 = vpop.f32.mrb[0].mxu0
        %v807 = vadd.f32 %v318, %v806
        %v808 = vpop.f32.mrb[0].mxu0
        %809 = vmatprep.mubr.f32.mxu0 0.0
        %810 = vmatmul.mubr.f32.gmra.mrb[0].mxu0 %v463
        %v811 = vpop.f32.mrb[0].mxu0
        %v812 = vadd.f32 %v318, %v811
        %v813 = vpop.f32.mrb[0].mxu0
        %814 = vmatprep.mubr.f32.mxu0 0.0
        %815 = vmatmul.mubr.f32.gmra.mrb[0].mxu0 %v466
        %v816 = vpop.f32.mrb[0].mxu0
        %v817 = vadd.f32 %v318, %v816
        %v818 = vpop.f32.mrb[0].mxu0
        %819 = vmatprep.mubr.f32.mxu0 0.0
        %820 = vmatmul.mubr.f32.gmra.mrb[0].mxu0 %v469
        %v821 = vpop.f32.mrb[0].mxu0
        %v822 = vadd.f32 %v318, %v821
        %v823 = vpop.f32.mrb[0].mxu0
        %824 = vmatprep.mubr.f32.mxu0 0.0
        %825 = vmatmul.mubr.f32.gmra.mrb[0].mxu0 %v472
        %v826 = vpop.f32.mrb[0].mxu0
        %v827 = vadd.f32 %v318, %v826
        %v828 = vpop.f32.mrb[0].mxu0
        %829 = vmatprep.mubr.f32.mxu0 0.0
        %830 = vmatmul.mubr.f32.gmra.mrb[0].mxu0 %v475
        %v831 = vpop.f32.mrb[0].mxu0
        %v832 = vadd.f32 %v318, %v831
        %v833 = vpop.f32.mrb[0].mxu0
        %834 = vmatprep.mubr.f32.mxu0 0.0
        %835 = vmatmul.mubr.f32.gmra.mrb[0].mxu0 %v478
        %v836 = vpop.f32.mrb[0].mxu0
        %v837 = vadd.f32 %v318, %v836
        %v838 = vpop.f32.mrb[0].mxu0
        %839 = vmatprep.mubr.f32.mxu0 0.0
        %840 = vmatmul.mubr.f32.gmra.mrb[0].mxu0 %v481
        %v841 = vpop.f32.mrb[0].mxu0
        %v842 = vadd.f32 %v318, %v841
        %v843 = vpop.f32.mrb[0].mxu0
        %844 = vmatprep.mubr.f32.mxu0 0.0
        %845 = vmatmul.mubr.f32.gmra.mrb[0].mxu0 %v484
        %v846 = vpop.f32.mrb[0].mxu0
        %v847 = vadd.f32 %v318, %v846
        %v848 = vpop.f32.mrb[0].mxu0
        %849 = vmatprep.mubr.f32.mxu0 0.0
        %850 = vmatmul.mubr.f32.gmra.mrb[0].mxu0 %v487
        %v851 = vpop.f32.mrb[0].mxu0
        %v852 = vadd.f32 %v318, %v851
        %v853 = vpop.f32.mrb[0].mxu0
        %854 = vmatprep.mubr.f32.mxu0 0.0
        %855 = vmatmul.mubr.f32.gmra.mrb[0].mxu0 %v490
        %v856 = vpop.f32.mrb[0].mxu0
        %v857 = vadd.f32 %v318, %v856
        %v858 = vpop.f32.mrb[0].mxu0
        %859 = vmatprep.mubr.f32.mxu0 0.0
        %860 = vmatmul.mubr.f32.gmra.mrb[0].mxu0 %v493
        %v861 = vpop.f32.mrb[0].mxu0
        %v862 = vadd.f32 %v318, %v861
        %v863 = vpop.f32.mrb[0].mxu0
        %864 = vmatprep.mubr.f32.mxu0 0.0
        %865 = vmatmul.mubr.f32.gmra.mrb[0].mxu0 %v496
        %v866 = vpop.f32.mrb[0].mxu0
        %v867 = vadd.f32 %v318, %v866
        %v868 = vpop.f32.mrb[0].mxu0
        %869 = vmatprep.mubr.f32.mxu0 0.0
        %870 = vmatmul.mubr.f32.gmra.mrb[0].mxu0 %v499
        %v871 = vpop.f32.mrb[0].mxu0
        %v872 = vadd.f32 %v318, %v871
        %v873 = vpop.f32.mrb[0].mxu0
        %874 = vmatprep.mubr.f32.mxu0 0.0
        %875 = vmatmul.mubr.f32.gmra.mrb[0].mxu0 %v502
        %v876 = vpop.f32.mrb[0].mxu0
        %v877 = vadd.f32 %v318, %v876
        %v878 = vpop.f32.mrb[0].mxu0
        %879 = vmatprep.mubr.f32.mxu0 0.0
        %880 = vmatmul.mubr.f32.gmra.mrb[0].mxu0 %v505
        %v881 = vpop.f32.mrb[0].mxu0
        %v882 = vadd.f32 %v318, %v881
        %v883 = vpop.f32.mrb[0].mxu0
        %884 = vmatprep.mubr.f32.mxu0 0.0
        %885 = vmatmul.mubr.f32.gmra.mrb[0].mxu0 %v508
        %v886 = vpop.f32.mrb[0].mxu0
        %v887 = vadd.f32 %v318, %v886
        %v888 = vpop.f32.mrb[0].mxu0
        %889 = vdwg.mxu0
        %v890 = vmax.f32 %v577, 0.0
        %v891 = vmax.f32 %v582, 0.0
        %v892 = vmax.f32 %v587, 0.0
        %v893 = vmax.f32 %v592, 0.0
        %v894 = vmax.f32 %v597, 0.0
        %v895 = vmax.f32 %v602, 0.0
        %v896 = vmax.f32 %v607, 0.0
        %v897 = vmax.f32 %v612, 0.0
        %v898 = vmax.f32 %v617, 0.0
        %v899 = vmax.f32 %v622, 0.0
        %v900 = vmax.f32 %v627, 0.0
        %v901 = vmax.f32 %v632, 0.0
        %v902 = vmax.f32 %v637, 0.0
        %v903 = vmax.f32 %v642, 0.0
        %v904 = vmax.f32 %v647, 0.0
        %v905 = vmax.f32 %v652, 0.0
        %v906 = vmax.f32 %v657, 0.0
        %v907 = vmax.f32 %v662, 0.0
        %v908 = vmax.f32 %v667, 0.0
        %v909 = vmax.f32 %v672, 0.0
        %v910 = vmax.f32 %v677, 0.0
        %v911 = vmax.f32 %v682, 0.0
        %v912 = vmax.f32 %v687, 0.0
        %v913 = vmax.f32 %v692, 0.0
        %v914 = vmax.f32 %v697, 0.0
        %v915 = vmax.f32 %v702, 0.0
        %v916 = vmax.f32 %v707, 0.0
        %v917 = vmax.f32 %v712, 0.0
        %v918 = vmax.f32 %v717, 0.0
        %v919 = vmax.f32 %v722, 0.0
        %v920 = vmax.f32 %v727, 0.0
        %v921 = vmax.f32 %v732, 0.0
        %v922 = vmax.f32 %v737, 0.0
        %v923 = vmax.f32 %v742, 0.0
        %v924 = vmax.f32 %v747, 0.0
        %v925 = vmax.f32 %v752, 0.0
        %v926 = vmax.f32 %v757, 0.0
        %v927 = vmax.f32 %v762, 0.0
        %v928 = vmax.f32 %v767, 0.0
        %v929 = vmax.f32 %v772, 0.0
        %v930 = vmax.f32 %v777, 0.0
        %v931 = vmax.f32 %v782, 0.0
        %v932 = vmax.f32 %v787, 0.0
        %v933 = vmax.f32 %v792, 0.0
        %v934 = vmax.f32 %v797, 0.0
        %v935 = vmax.f32 %v802, 0.0
        %v936 = vmax.f32 %v807, 0.0
        %v937 = vmax.f32 %v812, 0.0
        %v938 = vmax.f32 %v817, 0.0
        %v939 = vmax.f32 %v822, 0.0
        %v940 = vmax.f32 %v827, 0.0
        %v941 = vmax.f32 %v832, 0.0
        %v942 = vmax.f32 %v837, 0.0
        %v943 = vmax.f32 %v842, 0.0
        %v944 = vmax.f32 %v847, 0.0
        %v945 = vmax.f32 %v852, 0.0
        %v946 = vmax.f32 %v857, 0.0
        %v947 = vmax.f32 %v862, 0.0
        %v948 = vmax.f32 %v867, 0.0
        %v949 = vmax.f32 %v872, 0.0
        %v950 = vmax.f32 %v877, 0.0
        %v951 = vmax.f32 %v882, 0.0
        %v952 = vmax.f32 %v887, 0.0
        %v953 = vld [vmem:[%s3] sm:$0xff]
        %v954 = vld [vmem:[%s3 + $0x8] sm:$0xff]
        %v955 = vld [vmem:[%s3 + $0x10] sm:$0xff]
        %v956 = vld [vmem:[%s3 + $0x18] sm:$0xff]
        %v957 = vld [vmem:[%s3 + $0x20] sm:$0xff]
        %v958 = vld [vmem:[%s3 + $0x28] sm:$0xff]
        %v959 = vld [vmem:[%s3 + $0x30] sm:$0xff]
        %v960 = vld [vmem:[%s3 + $0x38] sm:$0xff]
        %v961 = vld [vmem:[%s3 + $0x40] sm:$0xff]
        %v962 = vld [vmem:[%s3 + $0x48] sm:$0xff]
        %v963 = vld [vmem:[%s3 + $0x50] sm:$0xff]
        %v964 = vld [vmem:[%s3 + $0x58] sm:$0xff]
        %v965 = vld [vmem:[%s3 + $0x60] sm:$0xff]
        %v966 = vld [vmem:[%s3 + $0x68] sm:$0xff]
        %v967 = vld [vmem:[%s3 + $0x70] sm:$0xff]
        %v968 = vld [vmem:[%s3 + $0x78] sm:$0xff]
        %v969 = vld [vmem:[%s4] sm:$0x1]
        %v971 = vlaneseq
        %v972 = vshrl.u32 %v971, 7
        %v973 = vsub.s32 0, %v972
        %v974 = vrot.slane %v969, %v973
        %976 = vmatprep.subr.mxu0 0.0
        %977 = vmatpush1.msra.mxu0 %v953
        %978 = vmatprep.subr.mxu0 0.0
        %979 = vmatpush1.msra.mxu0 %v954
        %980 = vmatprep.subr.mxu0 0.0
        %981 = vmatpush1.msra.mxu0 %v955
        %982 = vmatprep.subr.mxu0 0.0
        %983 = vmatpush1.msra.mxu0 %v956
        %984 = vmatprep.subr.mxu0 0.0
        %985 = vmatpush1.msra.mxu0 %v957
        %986 = vmatprep.subr.mxu0 0.0
        %987 = vmatpush1.msra.mxu0 %v958
        %988 = vmatprep.subr.mxu0 0.0
        %989 = vmatpush1.msra.mxu0 %v959
        %990 = vmatprep.subr.mxu0 0.0
        %991 = vmatpush1.msra.mxu0 %v960
        %992 = vmatprep.subr.mxu0 0.0
        %993 = vmatpush1.msra.mxu0 %v961
        %994 = vmatprep.subr.mxu0 0.0
        %995 = vmatpush1.msra.mxu0 %v962
        %996 = vmatprep.subr.mxu0 0.0
        %997 = vmatpush1.msra.mxu0 %v963
        %998 = vmatprep.subr.mxu0 0.0
        %999 = vmatpush1.msra.mxu0 %v964
        %1000 = vmatprep.subr.mxu0 0.0
        %1001 = vmatpush1.msra.mxu0 %v965
        %1002 = vmatprep.subr.mxu0 0.0
        %1003 = vmatpush1.msra.mxu0 %v966
        %1004 = vmatprep.subr.mxu0 0.0
        %1005 = vmatpush1.msra.mxu0 %v967
        %1006 = vmatprep.subr.mxu0 0.0
        %1007 = vmatpush1.msra.mxu0 %v968
        %1008 = vmatprep.subr.mxu0 0.0
        %1009 = vmatpush1.msra.mxu0 0.0
        %1010 = vmatprep.subr.mxu0 0.0
        %1011 = vmatpush1.msra.mxu0 0.0
        %1012 = vmatprep.subr.mxu0 0.0
        %1013 = vmatpush1.msra.mxu0 0.0
        %1014 = vmatprep.subr.mxu0 0.0
        %1015 = vmatpush1.msra.mxu0 0.0
        %1016 = vmatprep.subr.mxu0 0.0
        %1017 = vmatpush1.msra.mxu0 0.0
        %1018 = vmatprep.subr.mxu0 0.0
        %1019 = vmatpush1.msra.mxu0 0.0
        %1020 = vmatprep.subr.mxu0 0.0
        %1021 = vmatpush1.msra.mxu0 0.0
        %1022 = vmatprep.subr.mxu0 0.0
        %1023 = vmatpush1.msra.mxu0 0.0
        %1024 = vmatprep.subr.mxu0 0.0
        %1025 = vmatpush1.msra.mxu0 0.0
        %1026 = vmatprep.subr.mxu0 0.0
        %1027 = vmatpush1.msra.mxu0 0.0
        %1028 = vmatprep.subr.mxu0 0.0
        %1029 = vmatpush1.msra.mxu0 0.0
        %1030 = vmatprep.subr.mxu0 0.0
        %1031 = vmatpush1.msra.mxu0 0.0
        %1032 = vmatprep.subr.mxu0 0.0
        %1033 = vmatpush1.msra.mxu0 0.0
        %1034 = vmatprep.subr.mxu0 0.0
        %1035 = vmatpush1.msra.mxu0 0.0
        %1036 = vmatprep.subr.mxu0 0.0
        %1037 = vmatpush1.msra.mxu0 0.0
        %1038 = vmatprep.subr.mxu0 0.0
        %1039 = vmatpush1.msra.mxu0 0.0
        %1040 = vmatprep.mubr.f32.mxu0 0.0
        %1041 = vmatmul.mubr.f32.gmra.mrb[0].mxu0 %v890
        %v1042 = vpop.f32.mrb[0].mxu0
        %v1043 = vadd.f32 %v974, %v1042
        %v1044 = vpop.f32.mrb[0].mxu0
        %1045 = vmatprep.mubr.f32.mxu0 0.0
        %1046 = vmatmul.mubr.f32.gmra.mrb[0].mxu0 %v891
        %v1047 = vpop.f32.mrb[0].mxu0
        %v1048 = vadd.f32 %v974, %v1047
        %v1049 = vpop.f32.mrb[0].mxu0
        %1050 = vmatprep.mubr.f32.mxu0 0.0
        %1051 = vmatmul.mubr.f32.gmra.mrb[0].mxu0 %v892
        %v1052 = vpop.f32.mrb[0].mxu0
        %v1053 = vadd.f32 %v974, %v1052
        %v1054 = vpop.f32.mrb[0].mxu0
        %1055 = vmatprep.mubr.f32.mxu0 0.0
        %1056 = vmatmul.mubr.f32.gmra.mrb[0].mxu0 %v893
        %v1057 = vpop.f32.mrb[0].mxu0
        %v1058 = vadd.f32 %v974, %v1057
        %v1059 = vpop.f32.mrb[0].mxu0
        %1060 = vmatprep.mubr.f32.mxu0 0.0
        %1061 = vmatmul.mubr.f32.gmra.mrb[0].mxu0 %v894
        %v1062 = vpop.f32.mrb[0].mxu0
        %v1063 = vadd.f32 %v974, %v1062
        %v1064 = vpop.f32.mrb[0].mxu0
        %1065 = vmatprep.mubr.f32.mxu0 0.0
        %1066 = vmatmul.mubr.f32.gmra.mrb[0].mxu0 %v895
        %v1067 = vpop.f32.mrb[0].mxu0
        %v1068 = vadd.f32 %v974, %v1067
        %v1069 = vpop.f32.mrb[0].mxu0
        %1070 = vmatprep.mubr.f32.mxu0 0.0
        %1071 = vmatmul.mubr.f32.gmra.mrb[0].mxu0 %v896
        %v1072 = vpop.f32.mrb[0].mxu0
        %v1073 = vadd.f32 %v974, %v1072
        %v1074 = vpop.f32.mrb[0].mxu0
        %1075 = vmatprep.mubr.f32.mxu0 0.0
        %1076 = vmatmul.mubr.f32.gmra.mrb[0].mxu0 %v897
        %v1077 = vpop.f32.mrb[0].mxu0
        %v1078 = vadd.f32 %v974, %v1077
        %v1079 = vpop.f32.mrb[0].mxu0
        %1080 = vmatprep.mubr.f32.mxu0 0.0
        %1081 = vmatmul.mubr.f32.gmra.mrb[0].mxu0 %v898
        %v1082 = vpop.f32.mrb[0].mxu0
        %v1083 = vadd.f32 %v974, %v1082
        %v1084 = vpop.f32.mrb[0].mxu0
        %1085 = vmatprep.mubr.f32.mxu0 0.0
        %1086 = vmatmul.mubr.f32.gmra.mrb[0].mxu0 %v899
        %v1087 = vpop.f32.mrb[0].mxu0
        %v1088 = vadd.f32 %v974, %v1087
        %v1089 = vpop.f32.mrb[0].mxu0
        %1090 = vmatprep.mubr.f32.mxu0 0.0
        %1091 = vmatmul.mubr.f32.gmra.mrb[0].mxu0 %v900
        %v1092 = vpop.f32.mrb[0].mxu0
        %v1093 = vadd.f32 %v974, %v1092
        %v1094 = vpop.f32.mrb[0].mxu0
        %1095 = vmatprep.mubr.f32.mxu0 0.0
        %1096 = vmatmul.mubr.f32.gmra.mrb[0].mxu0 %v901
        %v1097 = vpop.f32.mrb[0].mxu0
        %v1098 = vadd.f32 %v974, %v1097
        %v1099 = vpop.f32.mrb[0].mxu0
        %1100 = vmatprep.mubr.f32.mxu0 0.0
        %1101 = vmatmul.mubr.f32.gmra.mrb[0].mxu0 %v902
        %v1102 = vpop.f32.mrb[0].mxu0
        %v1103 = vadd.f32 %v974, %v1102
        %v1104 = vpop.f32.mrb[0].mxu0
        %1105 = vmatprep.mubr.f32.mxu0 0.0
        %1106 = vmatmul.mubr.f32.gmra.mrb[0].mxu0 %v903
        %v1107 = vpop.f32.mrb[0].mxu0
        %v1108 = vadd.f32 %v974, %v1107
        %v1109 = vpop.f32.mrb[0].mxu0
        %1110 = vmatprep.mubr.f32.mxu0 0.0
        %1111 = vmatmul.mubr.f32.gmra.mrb[0].mxu0 %v904
        %v1112 = vpop.f32.mrb[0].mxu0
        %v1113 = vadd.f32 %v974, %v1112
        %v1114 = vpop.f32.mrb[0].mxu0
        %1115 = vmatprep.mubr.f32.mxu0 0.0
        %1116 = vmatmul.mubr.f32.gmra.mrb[0].mxu0 %v905
        %v1117 = vpop.f32.mrb[0].mxu0
        %v1118 = vadd.f32 %v974, %v1117
        %v1119 = vpop.f32.mrb[0].mxu0
        %1120 = vmatprep.mubr.f32.mxu0 0.0
        %1121 = vmatmul.mubr.f32.gmra.mrb[0].mxu0 %v906
        %v1122 = vpop.f32.mrb[0].mxu0
        %v1123 = vadd.f32 %v974, %v1122
        %v1124 = vpop.f32.mrb[0].mxu0
        %1125 = vmatprep.mubr.f32.mxu0 0.0
        %1126 = vmatmul.mubr.f32.gmra.mrb[0].mxu0 %v907
        %v1127 = vpop.f32.mrb[0].mxu0
        %v1128 = vadd.f32 %v974, %v1127
        %v1129 = vpop.f32.mrb[0].mxu0
        %1130 = vmatprep.mubr.f32.mxu0 0.0
        %1131 = vmatmul.mubr.f32.gmra.mrb[0].mxu0 %v908
        %v1132 = vpop.f32.mrb[0].mxu0
        %v1133 = vadd.f32 %v974, %v1132
        %v1134 = vpop.f32.mrb[0].mxu0
        %1135 = vmatprep.mubr.f32.mxu0 0.0
        %1136 = vmatmul.mubr.f32.gmra.mrb[0].mxu0 %v909
        %v1137 = vpop.f32.mrb[0].mxu0
        %v1138 = vadd.f32 %v974, %v1137
        %v1139 = vpop.f32.mrb[0].mxu0
        %1140 = vmatprep.mubr.f32.mxu0 0.0
        %1141 = vmatmul.mubr.f32.gmra.mrb[0].mxu0 %v910
        %v1142 = vpop.f32.mrb[0].mxu0
        %v1143 = vadd.f32 %v974, %v1142
        %v1144 = vpop.f32.mrb[0].mxu0
        %1145 = vmatprep.mubr.f32.mxu0 0.0
        %1146 = vmatmul.mubr.f32.gmra.mrb[0].mxu0 %v911
        %v1147 = vpop.f32.mrb[0].mxu0
        %v1148 = vadd.f32 %v974, %v1147
        %v1149 = vpop.f32.mrb[0].mxu0
        %1150 = vmatprep.mubr.f32.mxu0 0.0
        %1151 = vmatmul.mubr.f32.gmra.mrb[0].mxu0 %v912
        %v1152 = vpop.f32.mrb[0].mxu0
        %v1153 = vadd.f32 %v974, %v1152
        %v1154 = vpop.f32.mrb[0].mxu0
        %1155 = vmatprep.mubr.f32.mxu0 0.0
        %1156 = vmatmul.mubr.f32.gmra.mrb[0].mxu0 %v913
        %v1157 = vpop.f32.mrb[0].mxu0
        %v1158 = vadd.f32 %v974, %v1157
        %v1159 = vpop.f32.mrb[0].mxu0
        %1160 = vmatprep.mubr.f32.mxu0 0.0
        %1161 = vmatmul.mubr.f32.gmra.mrb[0].mxu0 %v914
        %v1162 = vpop.f32.mrb[0].mxu0
        %v1163 = vadd.f32 %v974, %v1162
        %v1164 = vpop.f32.mrb[0].mxu0
        %1165 = vmatprep.mubr.f32.mxu0 0.0
        %1166 = vmatmul.mubr.f32.gmra.mrb[0].mxu0 %v915
        %v1167 = vpop.f32.mrb[0].mxu0
        %v1168 = vadd.f32 %v974, %v1167
        %v1169 = vpop.f32.mrb[0].mxu0
        %1170 = vmatprep.mubr.f32.mxu0 0.0
        %1171 = vmatmul.mubr.f32.gmra.mrb[0].mxu0 %v916
        %v1172 = vpop.f32.mrb[0].mxu0
        %v1173 = vadd.f32 %v974, %v1172
        %v1174 = vpop.f32.mrb[0].mxu0
        %1175 = vmatprep.mubr.f32.mxu0 0.0
        %1176 = vmatmul.mubr.f32.gmra.mrb[0].mxu0 %v917
        %v1177 = vpop.f32.mrb[0].mxu0
        %v1178 = vadd.f32 %v974, %v1177
        %v1179 = vpop.f32.mrb[0].mxu0
        %1180 = vmatprep.mubr.f32.mxu0 0.0
        %1181 = vmatmul.mubr.f32.gmra.mrb[0].mxu0 %v918
        %v1182 = vpop.f32.mrb[0].mxu0
        %v1183 = vadd.f32 %v974, %v1182
        %v1184 = vpop.f32.mrb[0].mxu0
        %1185 = vmatprep.mubr.f32.mxu0 0.0
        %1186 = vmatmul.mubr.f32.gmra.mrb[0].mxu0 %v919
        %v1187 = vpop.f32.mrb[0].mxu0
        %v1188 = vadd.f32 %v974, %v1187
        %v1189 = vpop.f32.mrb[0].mxu0
        %1190 = vmatprep.mubr.f32.mxu0 0.0
        %1191 = vmatmul.mubr.f32.gmra.mrb[0].mxu0 %v920
        %v1192 = vpop.f32.mrb[0].mxu0
        %v1193 = vadd.f32 %v974, %v1192
        %v1194 = vpop.f32.mrb[0].mxu0
        %1195 = vmatprep.mubr.f32.mxu0 0.0
        %1196 = vmatmul.mubr.f32.gmra.mrb[0].mxu0 %v921
        %v1197 = vpop.f32.mrb[0].mxu0
        %v1198 = vadd.f32 %v974, %v1197
        %v1199 = vpop.f32.mrb[0].mxu0
        %1200 = vmatprep.mubr.f32.mxu0 0.0
        %1201 = vmatmul.mubr.f32.gmra.mrb[0].mxu0 %v922
        %v1202 = vpop.f32.mrb[0].mxu0
        %v1203 = vadd.f32 %v974, %v1202
        %v1204 = vpop.f32.mrb[0].mxu0
        %1205 = vmatprep.mubr.f32.mxu0 0.0
        %1206 = vmatmul.mubr.f32.gmra.mrb[0].mxu0 %v923
        %v1207 = vpop.f32.mrb[0].mxu0
        %v1208 = vadd.f32 %v974, %v1207
        %v1209 = vpop.f32.mrb[0].mxu0
        %1210 = vmatprep.mubr.f32.mxu0 0.0
        %1211 = vmatmul.mubr.f32.gmra.mrb[0].mxu0 %v924
        %v1212 = vpop.f32.mrb[0].mxu0
        %v1213 = vadd.f32 %v974, %v1212
        %v1214 = vpop.f32.mrb[0].mxu0
        %1215 = vmatprep.mubr.f32.mxu0 0.0
        %1216 = vmatmul.mubr.f32.gmra.mrb[0].mxu0 %v925
        %v1217 = vpop.f32.mrb[0].mxu0
        %v1218 = vadd.f32 %v974, %v1217
        %v1219 = vpop.f32.mrb[0].mxu0
        %1220 = vmatprep.mubr.f32.mxu0 0.0
        %1221 = vmatmul.mubr.f32.gmra.mrb[0].mxu0 %v926
        %v1222 = vpop.f32.mrb[0].mxu0
        %v1223 = vadd.f32 %v974, %v1222
        %v1224 = vpop.f32.mrb[0].mxu0
        %1225 = vmatprep.mubr.f32.mxu0 0.0
        %1226 = vmatmul.mubr.f32.gmra.mrb[0].mxu0 %v927
        %v1227 = vpop.f32.mrb[0].mxu0
        %v1228 = vadd.f32 %v974, %v1227
        %v1229 = vpop.f32.mrb[0].mxu0
        %1230 = vmatprep.mubr.f32.mxu0 0.0
        %1231 = vmatmul.mubr.f32.gmra.mrb[0].mxu0 %v928
        %v1232 = vpop.f32.mrb[0].mxu0
        %v1233 = vadd.f32 %v974, %v1232
        %v1234 = vpop.f32.mrb[0].mxu0
        %1235 = vmatprep.mubr.f32.mxu0 0.0
        %1236 = vmatmul.mubr.f32.gmra.mrb[0].mxu0 %v929
        %v1237 = vpop.f32.mrb[0].mxu0
        %v1238 = vadd.f32 %v974, %v1237
        %v1239 = vpop.f32.mrb[0].mxu0
        %1240 = vmatprep.mubr.f32.mxu0 0.0
        %1241 = vmatmul.mubr.f32.gmra.mrb[0].mxu0 %v930
        %v1242 = vpop.f32.mrb[0].mxu0
        %v1243 = vadd.f32 %v974, %v1242
        %v1244 = vpop.f32.mrb[0].mxu0
        %1245 = vmatprep.mubr.f32.mxu0 0.0
        %1246 = vmatmul.mubr.f32.gmra.mrb[0].mxu0 %v931
        %v1247 = vpop.f32.mrb[0].mxu0
        %v1248 = vadd.f32 %v974, %v1247
        %v1249 = vpop.f32.mrb[0].mxu0
        %1250 = vmatprep.mubr.f32.mxu0 0.0
        %1251 = vmatmul.mubr.f32.gmra.mrb[0].mxu0 %v932
        %v1252 = vpop.f32.mrb[0].mxu0
        %v1253 = vadd.f32 %v974, %v1252
        %v1254 = vpop.f32.mrb[0].mxu0
        %1255 = vmatprep.mubr.f32.mxu0 0.0
        %1256 = vmatmul.mubr.f32.gmra.mrb[0].mxu0 %v933
        %v1257 = vpop.f32.mrb[0].mxu0
        %v1258 = vadd.f32 %v974, %v1257
        %v1259 = vpop.f32.mrb[0].mxu0
        %1260 = vmatprep.mubr.f32.mxu0 0.0
        %1261 = vmatmul.mubr.f32.gmra.mrb[0].mxu0 %v934
        %v1262 = vpop.f32.mrb[0].mxu0
        %v1263 = vadd.f32 %v974, %v1262
        %v1264 = vpop.f32.mrb[0].mxu0
        %1265 = vmatprep.mubr.f32.mxu0 0.0
        %1266 = vmatmul.mubr.f32.gmra.mrb[0].mxu0 %v935
        %v1267 = vpop.f32.mrb[0].mxu0
        %v1268 = vadd.f32 %v974, %v1267
        %v1269 = vpop.f32.mrb[0].mxu0
        %1270 = vmatprep.mubr.f32.mxu0 0.0
        %1271 = vmatmul.mubr.f32.gmra.mrb[0].mxu0 %v936
        %v1272 = vpop.f32.mrb[0].mxu0
        %v1273 = vadd.f32 %v974, %v1272
        %v1274 = vpop.f32.mrb[0].mxu0
        %1275 = vmatprep.mubr.f32.mxu0 0.0
        %1276 = vmatmul.mubr.f32.gmra.mrb[0].mxu0 %v937
        %v1277 = vpop.f32.mrb[0].mxu0
        %v1278 = vadd.f32 %v974, %v1277
        %v1279 = vpop.f32.mrb[0].mxu0
        %1280 = vmatprep.mubr.f32.mxu0 0.0
        %1281 = vmatmul.mubr.f32.gmra.mrb[0].mxu0 %v938
        %v1282 = vpop.f32.mrb[0].mxu0
        %v1283 = vadd.f32 %v974, %v1282
        %v1284 = vpop.f32.mrb[0].mxu0
        %1285 = vmatprep.mubr.f32.mxu0 0.0
        %1286 = vmatmul.mubr.f32.gmra.mrb[0].mxu0 %v939
        %v1287 = vpop.f32.mrb[0].mxu0
        %v1288 = vadd.f32 %v974, %v1287
        %v1289 = vpop.f32.mrb[0].mxu0
        %1290 = vmatprep.mubr.f32.mxu0 0.0
        %1291 = vmatmul.mubr.f32.gmra.mrb[0].mxu0 %v940
        %v1292 = vpop.f32.mrb[0].mxu0
        %v1293 = vadd.f32 %v974, %v1292
        %v1294 = vpop.f32.mrb[0].mxu0
        %1295 = vmatprep.mubr.f32.mxu0 0.0
        %1296 = vmatmul.mubr.f32.gmra.mrb[0].mxu0 %v941
        %v1297 = vpop.f32.mrb[0].mxu0
        %v1298 = vadd.f32 %v974, %v1297
        %v1299 = vpop.f32.mrb[0].mxu0
        %1300 = vmatprep.mubr.f32.mxu0 0.0
        %1301 = vmatmul.mubr.f32.gmra.mrb[0].mxu0 %v942
        %v1302 = vpop.f32.mrb[0].mxu0
        %v1303 = vadd.f32 %v974, %v1302
        %v1304 = vpop.f32.mrb[0].mxu0
        %1305 = vmatprep.mubr.f32.mxu0 0.0
        %1306 = vmatmul.mubr.f32.gmra.mrb[0].mxu0 %v943
        %v1307 = vpop.f32.mrb[0].mxu0
        %v1308 = vadd.f32 %v974, %v1307
        %v1309 = vpop.f32.mrb[0].mxu0
        %1310 = vmatprep.mubr.f32.mxu0 0.0
        %1311 = vmatmul.mubr.f32.gmra.mrb[0].mxu0 %v944
        %v1312 = vpop.f32.mrb[0].mxu0
        %v1313 = vadd.f32 %v974, %v1312
        %v1314 = vpop.f32.mrb[0].mxu0
        %1315 = vmatprep.mubr.f32.mxu0 0.0
        %1316 = vmatmul.mubr.f32.gmra.mrb[0].mxu0 %v945
        %v1317 = vpop.f32.mrb[0].mxu0
        %v1318 = vadd.f32 %v974, %v1317
        %v1319 = vpop.f32.mrb[0].mxu0
        %1320 = vmatprep.mubr.f32.mxu0 0.0
        %1321 = vmatmul.mubr.f32.gmra.mrb[0].mxu0 %v946
        %v1322 = vpop.f32.mrb[0].mxu0
        %v1323 = vadd.f32 %v974, %v1322
        %v1324 = vpop.f32.mrb[0].mxu0
        %1325 = vmatprep.mubr.f32.mxu0 0.0
        %1326 = vmatmul.mubr.f32.gmra.mrb[0].mxu0 %v947
        %v1327 = vpop.f32.mrb[0].mxu0
        %v1328 = vadd.f32 %v974, %v1327
        %v1329 = vpop.f32.mrb[0].mxu0
        %1330 = vmatprep.mubr.f32.mxu0 0.0
        %1331 = vmatmul.mubr.f32.gmra.mrb[0].mxu0 %v948
        %v1332 = vpop.f32.mrb[0].mxu0
        %v1333 = vadd.f32 %v974, %v1332
        %v1334 = vpop.f32.mrb[0].mxu0
        %1335 = vmatprep.mubr.f32.mxu0 0.0
        %1336 = vmatmul.mubr.f32.gmra.mrb[0].mxu0 %v949
        %v1337 = vpop.f32.mrb[0].mxu0
        %v1338 = vadd.f32 %v974, %v1337
        %v1339 = vpop.f32.mrb[0].mxu0
        %1340 = vmatprep.mubr.f32.mxu0 0.0
        %1341 = vmatmul.mubr.f32.gmra.mrb[0].mxu0 %v950
        %v1342 = vpop.f32.mrb[0].mxu0
        %v1343 = vadd.f32 %v974, %v1342
        %v1344 = vpop.f32.mrb[0].mxu0
        %1345 = vmatprep.mubr.f32.mxu0 0.0
        %1346 = vmatmul.mubr.f32.gmra.mrb[0].mxu0 %v951
        %v1347 = vpop.f32.mrb[0].mxu0
        %v1348 = vadd.f32 %v974, %v1347
        %v1349 = vpop.f32.mrb[0].mxu0
        %1350 = vmatprep.mubr.f32.mxu0 0.0
        %1351 = vmatmul.mubr.f32.gmra.mrb[0].mxu0 %v952
        %v1352 = vpop.f32.mrb[0].mxu0
        %v1353 = vadd.f32 %v974, %v1352
        %v1354 = vpop.f32.mrb[0].mxu0
        %1355 = vdwg.mxu0
        %vm1356 = vcmask 130048
        %1357 = vst.msk [vmem:[%s226] sm:$0xff] %vm1356, %v1043
        %1358 = vst.msk [vmem:[%s226 + $0x8] sm:$0xff] %vm1356, %v1048
        %1359 = vst.msk [vmem:[%s226 + $0x10] sm:$0xff] %vm1356, %v1053
        %1360 = vst.msk [vmem:[%s226 + $0x18] sm:$0xff] %vm1356, %v1058
        %1361 = vst.msk [vmem:[%s226 + $0x20] sm:$0xff] %vm1356, %v1063
        %1362 = vst.msk [vmem:[%s226 + $0x28] sm:$0xff] %vm1356, %v1068
        %1363 = vst.msk [vmem:[%s226 + $0x30] sm:$0xff] %vm1356, %v1073
        %1364 = vst.msk [vmem:[%s226 + $0x38] sm:$0xff] %vm1356, %v1078
        %1365 = vst.msk [vmem:[%s226 + $0x40] sm:$0xff] %vm1356, %v1083
        %1366 = vst.msk [vmem:[%s226 + $0x48] sm:$0xff] %vm1356, %v1088
        %1367 = vst.msk [vmem:[%s226 + $0x50] sm:$0xff] %vm1356, %v1093
        %1368 = vst.msk [vmem:[%s226 + $0x58] sm:$0xff] %vm1356, %v1098
        %1369 = vst.msk [vmem:[%s226 + $0x60] sm:$0xff] %vm1356, %v1103
        %1370 = vst.msk [vmem:[%s226 + $0x68] sm:$0xff] %vm1356, %v1108
        %1371 = vst.msk [vmem:[%s226 + $0x70] sm:$0xff] %vm1356, %v1113
        %1372 = vst.msk [vmem:[%s226 + $0x78] sm:$0xff] %vm1356, %v1118
        %1373 = vst.msk [vmem:[%s226 + $0x80] sm:$0xff] %vm1356, %v1123
        %1374 = vst.msk [vmem:[%s226 + $0x88] sm:$0xff] %vm1356, %v1128
        %1375 = vst.msk [vmem:[%s226 + $0x90] sm:$0xff] %vm1356, %v1133
        %1376 = vst.msk [vmem:[%s226 + $0x98] sm:$0xff] %vm1356, %v1138
        %1377 = vst.msk [vmem:[%s226 + $0xa0] sm:$0xff] %vm1356, %v1143
        %1378 = vst.msk [vmem:[%s226 + $0xa8] sm:$0xff] %vm1356, %v1148
        %1379 = vst.msk [vmem:[%s226 + $0xb0] sm:$0xff] %vm1356, %v1153
        %1380 = vst.msk [vmem:[%s226 + $0xb8] sm:$0xff] %vm1356, %v1158
        %1381 = vst.msk [vmem:[%s226 + $0xc0] sm:$0xff] %vm1356, %v1163
        %1382 = vst.msk [vmem:[%s226 + $0xc8] sm:$0xff] %vm1356, %v1168
        %1383 = vst.msk [vmem:[%s226 + $0xd0] sm:$0xff] %vm1356, %v1173
        %1384 = vst.msk [vmem:[%s226 + $0xd8] sm:$0xff] %vm1356, %v1178
        %1385 = vst.msk [vmem:[%s226 + $0xe0] sm:$0xff] %vm1356, %v1183
        %1386 = vst.msk [vmem:[%s226 + $0xe8] sm:$0xff] %vm1356, %v1188
        %1387 = vst.msk [vmem:[%s226 + $0xf0] sm:$0xff] %vm1356, %v1193
        %1388 = vst.msk [vmem:[%s226 + $0xf8] sm:$0xff] %vm1356, %v1198
        %1389 = vst.msk [vmem:[%s226 + $0x100] sm:$0xff] %vm1356, %v1203
        %1390 = vst.msk [vmem:[%s226 + $0x108] sm:$0xff] %vm1356, %v1208
        %1391 = vst.msk [vmem:[%s226 + $0x110] sm:$0xff] %vm1356, %v1213
        %1392 = vst.msk [vmem:[%s226 + $0x118] sm:$0xff] %vm1356, %v1218
        %1393 = vst.msk [vmem:[%s226 + $0x120] sm:$0xff] %vm1356, %v1223
        %1394 = vst.msk [vmem:[%s226 + $0x128] sm:$0xff] %vm1356, %v1228
        %1395 = vst.msk [vmem:[%s226 + $0x130] sm:$0xff] %vm1356, %v1233
        %1396 = vst.msk [vmem:[%s226 + $0x138] sm:$0xff] %vm1356, %v1238
        %1397 = vst.msk [vmem:[%s226 + $0x140] sm:$0xff] %vm1356, %v1243
        %1398 = vst.msk [vmem:[%s226 + $0x148] sm:$0xff] %vm1356, %v1248
        %1399 = vst.msk [vmem:[%s226 + $0x150] sm:$0xff] %vm1356, %v1253
        %1400 = vst.msk [vmem:[%s226 + $0x158] sm:$0xff] %vm1356, %v1258
        %1401 = vst.msk [vmem:[%s226 + $0x160] sm:$0xff] %vm1356, %v1263
        %1402 = vst.msk [vmem:[%s226 + $0x168] sm:$0xff] %vm1356, %v1268
        %1403 = vst.msk [vmem:[%s226 + $0x170] sm:$0xff] %vm1356, %v1273
        %1404 = vst.msk [vmem:[%s226 + $0x178] sm:$0xff] %vm1356, %v1278
        %1405 = vst.msk [vmem:[%s226 + $0x180] sm:$0xff] %vm1356, %v1283
        %1406 = vst.msk [vmem:[%s226 + $0x188] sm:$0xff] %vm1356, %v1288
        %1407 = vst.msk [vmem:[%s226 + $0x190] sm:$0xff] %vm1356, %v1293
        %1408 = vst.msk [vmem:[%s226 + $0x198] sm:$0xff] %vm1356, %v1298
        %1409 = vst.msk [vmem:[%s226 + $0x1a0] sm:$0xff] %vm1356, %v1303
        %1410 = vst.msk [vmem:[%s226 + $0x1a8] sm:$0xff] %vm1356, %v1308
        %1411 = vst.msk [vmem:[%s226 + $0x1b0] sm:$0xff] %vm1356, %v1313
        %1412 = vst.msk [vmem:[%s226 + $0x1b8] sm:$0xff] %vm1356, %v1318
        %1413 = vst.msk [vmem:[%s226 + $0x1c0] sm:$0xff] %vm1356, %v1323
        %1414 = vst.msk [vmem:[%s226 + $0x1c8] sm:$0xff] %vm1356, %v1328
        %1415 = vst.msk [vmem:[%s226 + $0x1d0] sm:$0xff] %vm1356, %v1333
        %1416 = vst.msk [vmem:[%s226 + $0x1d8] sm:$0xff] %vm1356, %v1338
        %1417 = vst.msk [vmem:[%s226 + $0x1e0] sm:$0xff] %vm1356, %v1343
        %1418 = vst.msk [vmem:[%s226 + $0x1e8] sm:$0xff] %vm1356, %v1348
        %1419 = vst.msk [vmem:[%s226 + $0x1f0] sm:$0xff] %vm1356, %v1353
        %s1420 = sand.u32 %s134, 1
        %s1421 = sand.u32 %s134, 1
        %s1422 = smul.addr %s1421, 504
        %s1423 = scalar_lea.vmem [#allocation2], %s1422
        // Predicated region
        $region41: #{mlp_forward.1} parent=39 // pred_check
          %p1424 = pneg %p144
        $region42: #{mlp_forward.1} parent=39 // pred_check_branch
          %1426 = sbr.rel (%p1424) target = $region44
        $region43: #{mlp_forward.1} parent=39 // pred_region
          %s1427 = smul.u32 63, %s16
          %s1428 = ssub.s32 125, %s1427
          %p1429 = scmp.lt.s32.totalorder %s1428, 63
          %s1430 = scalar_select %p1429, %s1428, 63
          %s1431 = smul.u32 128, %s1430
          %p1432 = scmp.ne.s32.totalorder 0, %s1431
          %s1433 = smul.addr %s1427, 8
          %s1434 = scalar_lea.vmem %s5, %s1433
          // Predicated region
          $region45: #{mlp_forward.1} parent=43 // pred_check
            %p1435 = pneg %p1432
          $region46: #{mlp_forward.1} parent=43 // pred_check_branch
            %1437 = sbr.rel (%p1435) target = $region48
          $region47: #{mlp_forward.1} parent=43 // pred_region
            // Predicated region
            $region49: #{mlp_forward.1} parent=47 // pred_check
              _
            $region50: #{mlp_forward.1} parent=47 // pred_check_branch
              %1439 = sbr.rel (0) target = $region52
            $region51: #{mlp_forward.1} parent=47 // pred_region
              // Predicated region
              $region71: #{mlp_forward.1} parent=51 // pred_check
                _
              $region72: #{mlp_forward.1} parent=51 // pred_check_branch
                %1613 = sbr.rel (0) target = $region74
              $region73: #{mlp_forward.1} parent=51 // pred_region
                %s1614 = sdiv.u32.pop %s1430, 63
                %s1615 = srem.u32.pop %s1430, 63
                // While loop
                $region75: #{mlp_forward.1} parent=73 // loop_pre_header
                  _
                $region76: #{mlp_forward.1} parent=73 // loop_header
                  %s1617 = sphi 0, %s1619
                  %p1618 = scmp.ge.s32.totalorder %s1617, %s1614
                  %s1622 = sphi 0, %s1753
                  %s1623 = sphi %s1423, %s1756
                  %s1624 = sphi %s1434, %s1757
                $region77: #{mlp_forward.1} parent=73 // loop_header_branch
                  %1621 = sbr.rel (%p1618) target = $region81
                $region78: #{mlp_forward.1} parent=73 // loop_body
                  %v1625 = vld [vmem:[%s1623] sm:$0xff]
                  %1626 = vst [vmem:[%s1624] sm:$0xff] %v1625
                  %v1627 = vld [vmem:[%s1623 + $0x8] sm:$0xff]
                  %1628 = vst [vmem:[%s1624 + $0x8] sm:$0xff] %v1627
                  %v1629 = vld [vmem:[%s1623 + $0x10] sm:$0xff]
                  %1630 = vst [vmem:[%s1624 + $0x10] sm:$0xff] %v1629
                  %v1631 = vld [vmem:[%s1623 + $0x18] sm:$0xff]
                  %1632 = vst [vmem:[%s1624 + $0x18] sm:$0xff] %v1631
                  %v1633 = vld [vmem:[%s1623 + $0x20] sm:$0xff]
                  %1634 = vst [vmem:[%s1624 + $0x20] sm:$0xff] %v1633
                  %v1635 = vld [vmem:[%s1623 + $0x28] sm:$0xff]
                  %1636 = vst [vmem:[%s1624 + $0x28] sm:$0xff] %v1635
                  %v1637 = vld [vmem:[%s1623 + $0x30] sm:$0xff]
                  %1638 = vst [vmem:[%s1624 + $0x30] sm:$0xff] %v1637
                  %v1639 = vld [vmem:[%s1623 + $0x38] sm:$0xff]
                  %1640 = vst [vmem:[%s1624 + $0x38] sm:$0xff] %v1639
                  %v1641 = vld [vmem:[%s1623 + $0x40] sm:$0xff]
                  %1642 = vst [vmem:[%s1624 + $0x40] sm:$0xff] %v1641
                  %v1643 = vld [vmem:[%s1623 + $0x48] sm:$0xff]
                  %1644 = vst [vmem:[%s1624 + $0x48] sm:$0xff] %v1643
                  %v1645 = vld [vmem:[%s1623 + $0x50] sm:$0xff]
                  %1646 = vst [vmem:[%s1624 + $0x50] sm:$0xff] %v1645
                  %v1647 = vld [vmem:[%s1623 + $0x58] sm:$0xff]
                  %1648 = vst [vmem:[%s1624 + $0x58] sm:$0xff] %v1647
                  %v1649 = vld [vmem:[%s1623 + $0x60] sm:$0xff]
                  %1650 = vst [vmem:[%s1624 + $0x60] sm:$0xff] %v1649
                  %v1651 = vld [vmem:[%s1623 + $0x68] sm:$0xff]
                  %1652 = vst [vmem:[%s1624 + $0x68] sm:$0xff] %v1651
                  %v1653 = vld [vmem:[%s1623 + $0x70] sm:$0xff]
                  %1654 = vst [vmem:[%s1624 + $0x70] sm:$0xff] %v1653
                  %v1655 = vld [vmem:[%s1623 + $0x78] sm:$0xff]
                  %1656 = vst [vmem:[%s1624 + $0x78] sm:$0xff] %v1655
                  %v1657 = vld [vmem:[%s1623 + $0x80] sm:$0xff]
                  %1658 = vst [vmem:[%s1624 + $0x80] sm:$0xff] %v1657
                  %v1659 = vld [vmem:[%s1623 + $0x88] sm:$0xff]
                  %1660 = vst [vmem:[%s1624 + $0x88] sm:$0xff] %v1659
                  %v1661 = vld [vmem:[%s1623 + $0x90] sm:$0xff]
                  %1662 = vst [vmem:[%s1624 + $0x90] sm:$0xff] %v1661
                  %v1663 = vld [vmem:[%s1623 + $0x98] sm:$0xff]
                  %1664 = vst [vmem:[%s1624 + $0x98] sm:$0xff] %v1663
                  %v1665 = vld [vmem:[%s1623 + $0xa0] sm:$0xff]
                  %1666 = vst [vmem:[%s1624 + $0xa0] sm:$0xff] %v1665
                  %v1667 = vld [vmem:[%s1623 + $0xa8] sm:$0xff]
                  %1668 = vst [vmem:[%s1624 + $0xa8] sm:$0xff] %v1667
                  %v1669 = vld [vmem:[%s1623 + $0xb0] sm:$0xff]
                  %1670 = vst [vmem:[%s1624 + $0xb0] sm:$0xff] %v1669
                  %v1671 = vld [vmem:[%s1623 + $0xb8] sm:$0xff]
                  %1672 = vst [vmem:[%s1624 + $0xb8] sm:$0xff] %v1671
                  %v1673 = vld [vmem:[%s1623 + $0xc0] sm:$0xff]
                  %1674 = vst [vmem:[%s1624 + $0xc0] sm:$0xff] %v1673
                  %v1675 = vld [vmem:[%s1623 + $0xc8] sm:$0xff]
                  %1676 = vst [vmem:[%s1624 + $0xc8] sm:$0xff] %v1675
                  %v1677 = vld [vmem:[%s1623 + $0xd0] sm:$0xff]
                  %1678 = vst [vmem:[%s1624 + $0xd0] sm:$0xff] %v1677
                  %v1679 = vld [vmem:[%s1623 + $0xd8] sm:$0xff]
                  %1680 = vst [vmem:[%s1624 + $0xd8] sm:$0xff] %v1679
                  %v1681 = vld [vmem:[%s1623 + $0xe0] sm:$0xff]
                  %1682 = vst [vmem:[%s1624 + $0xe0] sm:$0xff] %v1681
                  %v1683 = vld [vmem:[%s1623 + $0xe8] sm:$0xff]
                  %1684 = vst [vmem:[%s1624 + $0xe8] sm:$0xff] %v1683
                  %v1685 = vld [vmem:[%s1623 + $0xf0] sm:$0xff]
                  %1686 = vst [vmem:[%s1624 + $0xf0] sm:$0xff] %v1685
                  %v1687 = vld [vmem:[%s1623 + $0xf8] sm:$0xff]
                  %1688 = vst [vmem:[%s1624 + $0xf8] sm:$0xff] %v1687
                  %v1689 = vld [vmem:[%s1623 + $0x100] sm:$0xff]
                  %1690 = vst [vmem:[%s1624 + $0x100] sm:$0xff] %v1689
                  %v1691 = vld [vmem:[%s1623 + $0x108] sm:$0xff]
                  %1692 = vst [vmem:[%s1624 + $0x108] sm:$0xff] %v1691
                  %v1693 = vld [vmem:[%s1623 + $0x110] sm:$0xff]
                  %1694 = vst [vmem:[%s1624 + $0x110] sm:$0xff] %v1693
                  %v1695 = vld [vmem:[%s1623 + $0x118] sm:$0xff]
                  %1696 = vst [vmem:[%s1624 + $0x118] sm:$0xff] %v1695
                  %v1697 = vld [vmem:[%s1623 + $0x120] sm:$0xff]
                  %1698 = vst [vmem:[%s1624 + $0x120] sm:$0xff] %v1697
                  %v1699 = vld [vmem:[%s1623 + $0x128] sm:$0xff]
                  %1700 = vst [vmem:[%s1624 + $0x128] sm:$0xff] %v1699
                  %v1701 = vld [vmem:[%s1623 + $0x130] sm:$0xff]
                  %1702 = vst [vmem:[%s1624 + $0x130] sm:$0xff] %v1701
                  %v1703 = vld [vmem:[%s1623 + $0x138] sm:$0xff]
                  %1704 = vst [vmem:[%s1624 + $0x138] sm:$0xff] %v1703
                  %v1705 = vld [vmem:[%s1623 + $0x140] sm:$0xff]
                  %1706 = vst [vmem:[%s1624 + $0x140] sm:$0xff] %v1705
                  %v1707 = vld [vmem:[%s1623 + $0x148] sm:$0xff]
                  %1708 = vst [vmem:[%s1624 + $0x148] sm:$0xff] %v1707
                  %v1709 = vld [vmem:[%s1623 + $0x150] sm:$0xff]
                  %1710 = vst [vmem:[%s1624 + $0x150] sm:$0xff] %v1709
                  %v1711 = vld [vmem:[%s1623 + $0x158] sm:$0xff]
                  %1712 = vst [vmem:[%s1624 + $0x158] sm:$0xff] %v1711
                  %v1713 = vld [vmem:[%s1623 + $0x160] sm:$0xff]
                  %1714 = vst [vmem:[%s1624 + $0x160] sm:$0xff] %v1713
                  %v1715 = vld [vmem:[%s1623 + $0x168] sm:$0xff]
                  %1716 = vst [vmem:[%s1624 + $0x168] sm:$0xff] %v1715
                  %v1717 = vld [vmem:[%s1623 + $0x170] sm:$0xff]
                  %1718 = vst [vmem:[%s1624 + $0x170] sm:$0xff] %v1717
                  %v1719 = vld [vmem:[%s1623 + $0x178] sm:$0xff]
                  %1720 = vst [vmem:[%s1624 + $0x178] sm:$0xff] %v1719
                  %v1721 = vld [vmem:[%s1623 + $0x180] sm:$0xff]
                  %1722 = vst [vmem:[%s1624 + $0x180] sm:$0xff] %v1721
                  %v1723 = vld [vmem:[%s1623 + $0x188] sm:$0xff]
                  %1724 = vst [vmem:[%s1624 + $0x188] sm:$0xff] %v1723
                  %v1725 = vld [vmem:[%s1623 + $0x190] sm:$0xff]
                  %1726 = vst [vmem:[%s1624 + $0x190] sm:$0xff] %v1725
                  %v1727 = vld [vmem:[%s1623 + $0x198] sm:$0xff]
                  %1728 = vst [vmem:[%s1624 + $0x198] sm:$0xff] %v1727
                  %v1729 = vld [vmem:[%s1623 + $0x1a0] sm:$0xff]
                  %1730 = vst [vmem:[%s1624 + $0x1a0] sm:$0xff] %v1729
                  %v1731 = vld [vmem:[%s1623 + $0x1a8] sm:$0xff]
                  %1732 = vst [vmem:[%s1624 + $0x1a8] sm:$0xff] %v1731
                  %v1733 = vld [vmem:[%s1623 + $0x1b0] sm:$0xff]
                  %1734 = vst [vmem:[%s1624 + $0x1b0] sm:$0xff] %v1733
                  %v1735 = vld [vmem:[%s1623 + $0x1b8] sm:$0xff]
                  %1736 = vst [vmem:[%s1624 + $0x1b8] sm:$0xff] %v1735
                  %v1737 = vld [vmem:[%s1623 + $0x1c0] sm:$0xff]
                  %1738 = vst [vmem:[%s1624 + $0x1c0] sm:$0xff] %v1737
                  %v1739 = vld [vmem:[%s1623 + $0x1c8] sm:$0xff]
                  %1740 = vst [vmem:[%s1624 + $0x1c8] sm:$0xff] %v1739
                  %v1741 = vld [vmem:[%s1623 + $0x1d0] sm:$0xff]
                  %1742 = vst [vmem:[%s1624 + $0x1d0] sm:$0xff] %v1741
                  %v1743 = vld [vmem:[%s1623 + $0x1d8] sm:$0xff]
                  %1744 = vst [vmem:[%s1624 + $0x1d8] sm:$0xff] %v1743
                  %v1745 = vld [vmem:[%s1623 + $0x1e0] sm:$0xff]
                  %1746 = vst [vmem:[%s1624 + $0x1e0] sm:$0xff] %v1745
                  %v1747 = vld [vmem:[%s1623 + $0x1e8] sm:$0xff]
                  %1748 = vst [vmem:[%s1624 + $0x1e8] sm:$0xff] %v1747
                  %v1749 = vld [vmem:[%s1623 + $0x1f0] sm:$0xff]
                  %1750 = vst [vmem:[%s1624 + $0x1f0] sm:$0xff] %v1749
                  %s1751 = sadd.s32 1, %s1622
                  %p1752 = scmp.ge.s32.totalorder %s1751, %s1614
                  %s1753 = scalar_select %p1752, 0, %s1751
                  %s1754 = smul.u32 %s1753, 504
                  %s1755 = smul.u32 %s1753, 504
                  %s1756 = scalar_lea.vmem %s1423, %s1754 [#allocation2]
                  %s1757 = scalar_lea.vmem %s1434, %s1755
                $region79: #{mlp_forward.1} parent=73 // loop_footer
                  %s1619 = sadd.s32 %s1617, 1
                $region80: #{mlp_forward.1} parent=73 // loop_footer_branch
                  %1616 = sbr.rel target = $region76
                $region81: #{mlp_forward.1} parent=73 // loop_exit
                  _
                %s1758 = sdiv.u32.pop %s1430, 63
                %s1759 = srem.u32.pop %s1430, 63
                %s1760 = smul.u32 %s1758, 63
                %s1761 = smul.u32 8, %s1760
                %s1762 = scalar_lea.vmem %s1423, %s1761 [#allocation2]
                %s1763 = smul.u32 8, %s1760
                %s1764 = scalar_lea.vmem %s1434, %s1763
                // While loop
                $region82: #{mlp_forward.1} parent=73 // loop_pre_header
                  _
                $region83: #{mlp_forward.1} parent=73 // loop_header
                  %s1766 = sphi 0, %s1768
                  %p1767 = scmp.ge.s32.totalorder %s1766, %s1759
                  %s1771 = sphi 0, %s1778
                  %s1772 = sphi %s1762, %s1781
                  %s1773 = sphi %s1764, %s1782
                $region84: #{mlp_forward.1} parent=73 // loop_header_branch
                  %1770 = sbr.rel (%p1767) target = $region88
                $region85: #{mlp_forward.1} parent=73 // loop_body
                  %v1774 = vld [vmem:[%s1772] sm:$0xff]
                  %1775 = vst [vmem:[%s1773] sm:$0xff] %v1774
                  %s1776 = sadd.s32 1, %s1771
                  %p1777 = scmp.ge.s32.totalorder %s1776, %s1759
                  %s1778 = scalar_select %p1777, 0, %s1776
                  %s1779 = smul.u32 %s1778, 8
                  %s1780 = smul.u32 %s1778, 8
                  %s1781 = scalar_lea.vmem %s1762, %s1779 [#allocation2]
                  %s1782 = scalar_lea.vmem %s1764, %s1780
                $region86: #{mlp_forward.1} parent=73 // loop_footer
                  %s1768 = sadd.s32 %s1766, 1
                $region87: #{mlp_forward.1} parent=73 // loop_footer_branch
                  %1765 = sbr.rel target = $region83
                $region88: #{mlp_forward.1} parent=73 // loop_exit
                  _
              $region74: #{mlp_forward.1} parent=51 // pred_fallthru
                _
              // Predicated region
              $region89: #{mlp_forward.1} parent=51 // pred_check
                _
              $region90: #{mlp_forward.1} parent=51 // pred_check_branch
                %1784 = sbr.rel target = $region92
              $region91: #{mlp_forward.1} parent=51 // pred_region
                _
              $region92: #{mlp_forward.1} parent=51 // pred_fallthru
                _
            $region52: #{mlp_forward.1} parent=47 // pred_fallthru
              _
            // Predicated region
            $region53: #{mlp_forward.1} parent=47 // pred_check
              _
            $region54: #{mlp_forward.1} parent=47 // pred_check_branch
              %1441 = sbr.rel target = $region56
            $region55: #{mlp_forward.1} parent=47 // pred_region
              %s1443 = sdiv.u32.pop %s1430, 63
              %s1444 = srem.u32.pop %s1430, 63
              // While loop
              $region57: #{mlp_forward.1} parent=55 // loop_pre_header
                _
              $region58: #{mlp_forward.1} parent=55 // loop_header
                %s1446 = sphi 0, %s1448
                %p1447 = scmp.ge.s32.totalorder %s1446, %s1443
                %s1451 = sphi 0, %s1582
                %s1452 = sphi %s1423, %s1585
                %s1453 = sphi %s1434, %s1586
              $region59: #{mlp_forward.1} parent=55 // loop_header_branch
                %1450 = sbr.rel (%p1447) target = $region63
              $region60: #{mlp_forward.1} parent=55 // loop_body
                %v1454 = vld [vmem:[%s1452] sm:$0xff]
                %1455 = vst [vmem:[%s1453] sm:$0xff] %v1454
                %v1456 = vld [vmem:[%s1452 + $0x8] sm:$0xff]
                %1457 = vst [vmem:[%s1453 + $0x8] sm:$0xff] %v1456
                %v1458 = vld [vmem:[%s1452 + $0x10] sm:$0xff]
                %1459 = vst [vmem:[%s1453 + $0x10] sm:$0xff] %v1458
                %v1460 = vld [vmem:[%s1452 + $0x18] sm:$0xff]
                %1461 = vst [vmem:[%s1453 + $0x18] sm:$0xff] %v1460
                %v1462 = vld [vmem:[%s1452 + $0x20] sm:$0xff]
                %1463 = vst [vmem:[%s1453 + $0x20] sm:$0xff] %v1462
                %v1464 = vld [vmem:[%s1452 + $0x28] sm:$0xff]
                %1465 = vst [vmem:[%s1453 + $0x28] sm:$0xff] %v1464
                %v1466 = vld [vmem:[%s1452 + $0x30] sm:$0xff]
                %1467 = vst [vmem:[%s1453 + $0x30] sm:$0xff] %v1466
                %v1468 = vld [vmem:[%s1452 + $0x38] sm:$0xff]
                %1469 = vst [vmem:[%s1453 + $0x38] sm:$0xff] %v1468
                %v1470 = vld [vmem:[%s1452 + $0x40] sm:$0xff]
                %1471 = vst [vmem:[%s1453 + $0x40] sm:$0xff] %v1470
                %v1472 = vld [vmem:[%s1452 + $0x48] sm:$0xff]
                %1473 = vst [vmem:[%s1453 + $0x48] sm:$0xff] %v1472
                %v1474 = vld [vmem:[%s1452 + $0x50] sm:$0xff]
                %1475 = vst [vmem:[%s1453 + $0x50] sm:$0xff] %v1474
                %v1476 = vld [vmem:[%s1452 + $0x58] sm:$0xff]
                %1477 = vst [vmem:[%s1453 + $0x58] sm:$0xff] %v1476
                %v1478 = vld [vmem:[%s1452 + $0x60] sm:$0xff]
                %1479 = vst [vmem:[%s1453 + $0x60] sm:$0xff] %v1478
                %v1480 = vld [vmem:[%s1452 + $0x68] sm:$0xff]
                %1481 = vst [vmem:[%s1453 + $0x68] sm:$0xff] %v1480
                %v1482 = vld [vmem:[%s1452 + $0x70] sm:$0xff]
                %1483 = vst [vmem:[%s1453 + $0x70] sm:$0xff] %v1482
                %v1484 = vld [vmem:[%s1452 + $0x78] sm:$0xff]
                %1485 = vst [vmem:[%s1453 + $0x78] sm:$0xff] %v1484
                %v1486 = vld [vmem:[%s1452 + $0x80] sm:$0xff]
                %1487 = vst [vmem:[%s1453 + $0x80] sm:$0xff] %v1486
                %v1488 = vld [vmem:[%s1452 + $0x88] sm:$0xff]
                %1489 = vst [vmem:[%s1453 + $0x88] sm:$0xff] %v1488
                %v1490 = vld [vmem:[%s1452 + $0x90] sm:$0xff]
                %1491 = vst [vmem:[%s1453 + $0x90] sm:$0xff] %v1490
                %v1492 = vld [vmem:[%s1452 + $0x98] sm:$0xff]
                %1493 = vst [vmem:[%s1453 + $0x98] sm:$0xff] %v1492
                %v1494 = vld [vmem:[%s1452 + $0xa0] sm:$0xff]
                %1495 = vst [vmem:[%s1453 + $0xa0] sm:$0xff] %v1494
                %v1496 = vld [vmem:[%s1452 + $0xa8] sm:$0xff]
                %1497 = vst [vmem:[%s1453 + $0xa8] sm:$0xff] %v1496
                %v1498 = vld [vmem:[%s1452 + $0xb0] sm:$0xff]
                %1499 = vst [vmem:[%s1453 + $0xb0] sm:$0xff] %v1498
                %v1500 = vld [vmem:[%s1452 + $0xb8] sm:$0xff]
                %1501 = vst [vmem:[%s1453 + $0xb8] sm:$0xff] %v1500
                %v1502 = vld [vmem:[%s1452 + $0xc0] sm:$0xff]
                %1503 = vst [vmem:[%s1453 + $0xc0] sm:$0xff] %v1502
                %v1504 = vld [vmem:[%s1452 + $0xc8] sm:$0xff]
                %1505 = vst [vmem:[%s1453 + $0xc8] sm:$0xff] %v1504
                %v1506 = vld [vmem:[%s1452 + $0xd0] sm:$0xff]
                %1507 = vst [vmem:[%s1453 + $0xd0] sm:$0xff] %v1506
                %v1508 = vld [vmem:[%s1452 + $0xd8] sm:$0xff]
                %1509 = vst [vmem:[%s1453 + $0xd8] sm:$0xff] %v1508
                %v1510 = vld [vmem:[%s1452 + $0xe0] sm:$0xff]
                %1511 = vst [vmem:[%s1453 + $0xe0] sm:$0xff] %v1510
                %v1512 = vld [vmem:[%s1452 + $0xe8] sm:$0xff]
                %1513 = vst [vmem:[%s1453 + $0xe8] sm:$0xff] %v1512
                %v1514 = vld [vmem:[%s1452 + $0xf0] sm:$0xff]
                %1515 = vst [vmem:[%s1453 + $0xf0] sm:$0xff] %v1514
                %v1516 = vld [vmem:[%s1452 + $0xf8] sm:$0xff]
                %1517 = vst [vmem:[%s1453 + $0xf8] sm:$0xff] %v1516
                %v1518 = vld [vmem:[%s1452 + $0x100] sm:$0xff]
                %1519 = vst [vmem:[%s1453 + $0x100] sm:$0xff] %v1518
                %v1520 = vld [vmem:[%s1452 + $0x108] sm:$0xff]
                %1521 = vst [vmem:[%s1453 + $0x108] sm:$0xff] %v1520
                %v1522 = vld [vmem:[%s1452 + $0x110] sm:$0xff]
                %1523 = vst [vmem:[%s1453 + $0x110] sm:$0xff] %v1522
                %v1524 = vld [vmem:[%s1452 + $0x118] sm:$0xff]
                %1525 = vst [vmem:[%s1453 + $0x118] sm:$0xff] %v1524
                %v1526 = vld [vmem:[%s1452 + $0x120] sm:$0xff]
                %1527 = vst [vmem:[%s1453 + $0x120] sm:$0xff] %v1526
                %v1528 = vld [vmem:[%s1452 + $0x128] sm:$0xff]
                %1529 = vst [vmem:[%s1453 + $0x128] sm:$0xff] %v1528
                %v1530 = vld [vmem:[%s1452 + $0x130] sm:$0xff]
                %1531 = vst [vmem:[%s1453 + $0x130] sm:$0xff] %v1530
                %v1532 = vld [vmem:[%s1452 + $0x138] sm:$0xff]
                %1533 = vst [vmem:[%s1453 + $0x138] sm:$0xff] %v1532
                %v1534 = vld [vmem:[%s1452 + $0x140] sm:$0xff]
                %1535 = vst [vmem:[%s1453 + $0x140] sm:$0xff] %v1534
                %v1536 = vld [vmem:[%s1452 + $0x148] sm:$0xff]
                %1537 = vst [vmem:[%s1453 + $0x148] sm:$0xff] %v1536
                %v1538 = vld [vmem:[%s1452 + $0x150] sm:$0xff]
                %1539 = vst [vmem:[%s1453 + $0x150] sm:$0xff] %v1538
                %v1540 = vld [vmem:[%s1452 + $0x158] sm:$0xff]
                %1541 = vst [vmem:[%s1453 + $0x158] sm:$0xff] %v1540
                %v1542 = vld [vmem:[%s1452 + $0x160] sm:$0xff]
                %1543 = vst [vmem:[%s1453 + $0x160] sm:$0xff] %v1542
                %v1544 = vld [vmem:[%s1452 + $0x168] sm:$0xff]
                %1545 = vst [vmem:[%s1453 + $0x168] sm:$0xff] %v1544
                %v1546 = vld [vmem:[%s1452 + $0x170] sm:$0xff]
                %1547 = vst [vmem:[%s1453 + $0x170] sm:$0xff] %v1546
                %v1548 = vld [vmem:[%s1452 + $0x178] sm:$0xff]
                %1549 = vst [vmem:[%s1453 + $0x178] sm:$0xff] %v1548
                %v1550 = vld [vmem:[%s1452 + $0x180] sm:$0xff]
                %1551 = vst [vmem:[%s1453 + $0x180] sm:$0xff] %v1550
                %v1552 = vld [vmem:[%s1452 + $0x188] sm:$0xff]
                %1553 = vst [vmem:[%s1453 + $0x188] sm:$0xff] %v1552
                %v1554 = vld [vmem:[%s1452 + $0x190] sm:$0xff]
                %1555 = vst [vmem:[%s1453 + $0x190] sm:$0xff] %v1554
                %v1556 = vld [vmem:[%s1452 + $0x198] sm:$0xff]
                %1557 = vst [vmem:[%s1453 + $0x198] sm:$0xff] %v1556
                %v1558 = vld [vmem:[%s1452 + $0x1a0] sm:$0xff]
                %1559 = vst [vmem:[%s1453 + $0x1a0] sm:$0xff] %v1558
                %v1560 = vld [vmem:[%s1452 + $0x1a8] sm:$0xff]
                %1561 = vst [vmem:[%s1453 + $0x1a8] sm:$0xff] %v1560
                %v1562 = vld [vmem:[%s1452 + $0x1b0] sm:$0xff]
                %1563 = vst [vmem:[%s1453 + $0x1b0] sm:$0xff] %v1562
                %v1564 = vld [vmem:[%s1452 + $0x1b8] sm:$0xff]
                %1565 = vst [vmem:[%s1453 + $0x1b8] sm:$0xff] %v1564
                %v1566 = vld [vmem:[%s1452 + $0x1c0] sm:$0xff]
                %1567 = vst [vmem:[%s1453 + $0x1c0] sm:$0xff] %v1566
                %v1568 = vld [vmem:[%s1452 + $0x1c8] sm:$0xff]
                %1569 = vst [vmem:[%s1453 + $0x1c8] sm:$0xff] %v1568
                %v1570 = vld [vmem:[%s1452 + $0x1d0] sm:$0xff]
                %1571 = vst [vmem:[%s1453 + $0x1d0] sm:$0xff] %v1570
                %v1572 = vld [vmem:[%s1452 + $0x1d8] sm:$0xff]
                %1573 = vst [vmem:[%s1453 + $0x1d8] sm:$0xff] %v1572
                %v1574 = vld [vmem:[%s1452 + $0x1e0] sm:$0xff]
                %1575 = vst [vmem:[%s1453 + $0x1e0] sm:$0xff] %v1574
                %v1576 = vld [vmem:[%s1452 + $0x1e8] sm:$0xff]
                %1577 = vst [vmem:[%s1453 + $0x1e8] sm:$0xff] %v1576
                %v1578 = vld [vmem:[%s1452 + $0x1f0] sm:$0xff]
                %1579 = vst [vmem:[%s1453 + $0x1f0] sm:$0xff] %v1578
                %s1580 = sadd.s32 1, %s1451
                %p1581 = scmp.ge.s32.totalorder %s1580, %s1443
                %s1582 = scalar_select %p1581, 0, %s1580
                %s1583 = smul.u32 %s1582, 504
                %s1584 = smul.u32 %s1582, 504
                %s1585 = scalar_lea.vmem %s1423, %s1583 [#allocation2]
                %s1586 = scalar_lea.vmem %s1434, %s1584
              $region61: #{mlp_forward.1} parent=55 // loop_footer
                %s1448 = sadd.s32 %s1446, 1
              $region62: #{mlp_forward.1} parent=55 // loop_footer_branch
                %1445 = sbr.rel target = $region58
              $region63: #{mlp_forward.1} parent=55 // loop_exit
                _
              %s1587 = sdiv.u32.pop %s1430, 63
              %s1588 = srem.u32.pop %s1430, 63
              %s1589 = smul.u32 %s1587, 63
              %s1590 = smul.u32 8, %s1589
              %s1591 = scalar_lea.vmem %s1423, %s1590 [#allocation2]
              %s1592 = smul.u32 8, %s1589
              %s1593 = scalar_lea.vmem %s1434, %s1592
              // While loop
              $region64: #{mlp_forward.1} parent=55 // loop_pre_header
                _
              $region65: #{mlp_forward.1} parent=55 // loop_header
                %s1595 = sphi 0, %s1597
                %p1596 = scmp.ge.s32.totalorder %s1595, %s1588
                %s1600 = sphi 0, %s1607
                %s1601 = sphi %s1591, %s1610
                %s1602 = sphi %s1593, %s1611
              $region66: #{mlp_forward.1} parent=55 // loop_header_branch
                %1599 = sbr.rel (%p1596) target = $region70
              $region67: #{mlp_forward.1} parent=55 // loop_body
                %v1603 = vld [vmem:[%s1601] sm:$0xff]
                %1604 = vst [vmem:[%s1602] sm:$0xff] %v1603
                %s1605 = sadd.s32 1, %s1600
                %p1606 = scmp.ge.s32.totalorder %s1605, %s1588
                %s1607 = scalar_select %p1606, 0, %s1605
                %s1608 = smul.u32 %s1607, 8
                %s1609 = smul.u32 %s1607, 8
                %s1610 = scalar_lea.vmem %s1591, %s1608 [#allocation2]
                %s1611 = scalar_lea.vmem %s1593, %s1609
              $region68: #{mlp_forward.1} parent=55 // loop_footer
                %s1597 = sadd.s32 %s1595, 1
              $region69: #{mlp_forward.1} parent=55 // loop_footer_branch
                %1594 = sbr.rel target = $region65
              $region70: #{mlp_forward.1} parent=55 // loop_exit
                _
            $region56: #{mlp_forward.1} parent=47 // pred_fallthru
              _
          $region48: #{mlp_forward.1} parent=43 // pred_fallthru
            _
          %1785 = vnop
        $region44: #{mlp_forward.1} parent=39 // pred_fallthru
          _
      $region40: #{mlp_forward.1} parent=5 // pred_fallthru
        _
      %p1786 = scmp.le.s32.totalorder 2, %s11
      // Predicated region
      $region93: #{mlp_forward.1} parent=5 // pred_check
        %p1787 = pneg %p1786
      $region94: #{mlp_forward.1} parent=5 // pred_check_branch
        %1789 = sbr.rel (%p1787) target = $region96
      $region95: #{mlp_forward.1} parent=5 // pred_region
        %s1790 = ssub.s32 %s11, 2
        // Predicated region
        $region97: #{mlp_forward.1} parent=95 // pred_check
          %p1791 = pneg %p150
        $region98: #{mlp_forward.1} parent=95 // pred_check_branch
          %1793 = sbr.rel (%p1791) target = $region100
        $region99: #{mlp_forward.1} parent=95 // pred_region
          %s1794 = sand.u32 %s135, 1
          %s1795 = sand.u32 %s135, 1
          %s1796 = smul.addr %s1795, 504
          %s1797 = scalar_lea.vmem [#allocation2], %s1796
        $region100: #{mlp_forward.1} parent=95 // pred_fallthru
          _
      $region96: #{mlp_forward.1} parent=5 // pred_fallthru
        _
    $region6: #{mlp_forward.1} parent=1 // loop_footer
      %s15 = sadd.s32 1, %s11
    $region7: #{mlp_forward.1} parent=1 // loop_footer_branch
      %10 = sbr.rel target = $region3
    $region8: #{mlp_forward.1} parent=1 // loop_exit
      _

</llo_original>
